<compile_context>
chip_gen: v7x
topology: tpu7x:2x2x1
jax: 0.10.0
libtpu: 0.0.40
codegen_flags: <defaults>
</compile_context>

<pallas_src>
import functools
import math

import numpy as np
import jax
import jax.numpy as jnp
from jax.experimental import pallas as pl
from jax.experimental.pallas import tpu as pltpu


# ----------------------------- Pallas kernel ------------------------------- #
def timefilm_kernel(time_ref, x_ref, ws_ref, ph_ref, sc_ref,
                    wg_ref, wb_ref, cwf_ref, cb_ref, out_ref, *, T, K, F):
    """One grid step = `bb` whole batches flattened to R = bb*T rows.

    time_ref: (R, 1) f32     x_ref: (R, F) bf16|f32     out_ref: (R, F)
    ws/ph/sc: (1, Fe) f32    wg/wb:  (Fe, F) bf16
    cwf:      (K*F, F) bf16  cb:     (1, F) f32
    """
    f32 = jnp.float32
    bf16 = jnp.bfloat16
    R = x_ref.shape[0]

    # Temporal encoding in f32: scale * sin(w * t + phase)  -> (R, Fe).
    te = sc_ref[...] * jnp.sin(ws_ref[...] * time_ref[...] + ph_ref[...])

    # FiLM params: two tiny (R,Fe)@(Fe,F) MXU passes (Fe ~ 8, so a fused 2F
    # matmul + lane split would only add shuffles when F isn't 128-aligned).
    te_bf = te.astype(bf16)
    gamma = jnp.dot(te_bf, wg_ref[...], preferred_element_type=f32)
    beta = jnp.dot(te_bf, wb_ref[...], preferred_element_type=f32)
    x_mod = jnp.tanh(gamma) * x_ref[...].astype(f32) + beta            # (R, F) f32

    # Causal Conv1d (left pad K-1, bias). Tap k uses delay d = K-1-k: a sublane
    # roll plus a (R,1) boundary mask (batches are contiguous T-row groups
    # inside the block; the mask also kills the wrap introduced by the roll).
    tloc = jax.lax.broadcasted_iota(jnp.int32, (R, 1), 0) % T

    def tap_f32(d):
        if d == 0:
            return x_mod
        # Static-shift roll -> sublane shifts (pltpu.roll is the explicit XLU form).
        shifted = jnp.roll(x_mod, d, axis=0)
        return jnp.where(tloc >= d, shifted, 0.0)

    if F % 128 == 0:
        # 128-aligned features: K accumulating (R,F)@(F,F) dots; the contraction
        # already fills the MXU and we skip the (R,K*F) concat temporary.
        acc = None
        for k in range(K):
            w_k = cwf_ref[k * F:(k + 1) * F, :]                 # tile-aligned slice
            part = jnp.dot(tap_f32(K - 1 - k).astype(bf16), w_k,
                           preferred_element_type=f32)
            acc = part if acc is None else acc + part
        conv = acc + cb_ref[...]
    else:
        # Small / unaligned F: fuse the K taps into one (R,K*F)@(K*F,F) matmul
        # so the contraction dimension is better filled.
        stack = jnp.concatenate([tap_f32(K - 1 - k) for k in range(K)], axis=1)
        conv = jnp.dot(stack.astype(bf16), cwf_ref[...],
                       preferred_element_type=f32) + cb_ref[...]

    # ReLU (relu_negative_slope = 0).
    out_ref[...] = jnp.maximum(conv, 0.0).astype(out_ref.dtype)


# --------------------------- block-size selection --------------------------- #
def _pick_batch_block(B, T, target_rows=512):
    """Largest whole-batch block with R = bb*T rows such that (a) R stays under
    ~target_rows (per-step VMEM / pipelining), (b) the grid has >= 2 steps when
    possible (megacore + DMA/compute overlap), and (c) R is 16-row aligned when
    possible so x can be shipped as bf16."""
    divisors = [d for d in range(1, B + 1) if B % d == 0]
    best = B
    for row_align in (16, 8):
        legal = [d for d in divisors if d == B or (d * T) % row_align == 0]
        within = [d for d in legal if d * T <= target_rows] or [min(legal)]
        multi = [d for d in within if B // d >= 2]
        if multi:
            return max(multi)
        best = max(within)
    return best


# ------------------------------ JAX wrapper -------------------------------- #
def timefilm_forward(x, time, onehot, params, *, batch_block=None,
                     target_rows=512, pad_features=False):
    """x: (B,T,F), time: (B,T), onehot: (B,T).

    onehot is unused because padding_value=None in this configuration (module
    defaults -> no seq_clean masking). Eval mode -> no time noise.
    """
    del onehot
    B, T, F = x.shape
    K = params["cw"].shape[0]
    Fe = params["wg"].shape[0]

    bb = _pick_batch_block(B, T, target_rows) if batch_block is None else batch_block
    assert B % bb == 0, "batch_block must divide the batch size"
    R = bb * T
    assert bb == B or R % 8 == 0, "row block must be a multiple of 8 sublanes"
    grid = (B // bb,)

    # Lane padding: a 128-aligned feature dim keeps output stores unmasked and
    # the MXU contraction fully packed (use for production unaligned F).
    Fp = ((F + 127) // 128) * 128 if (pad_features and F % 128 != 0) else F

    # bf16 MXU operands (f32 accumulation happens inside the kernel's dots).
    x_dt = jnp.bfloat16 if R % 16 == 0 else x.dtype
    x_flat = x.reshape(B * T, F).astype(x_dt)
    time_col = time.reshape(B * T, 1).astype(jnp.float32)
    wg = params["wg"].astype(jnp.bfloat16)
    wb = params["wb"].astype(jnp.bfloat16)
    cw = params["cw"].astype(jnp.bfloat16)                       # (K, F, F)
    cb = params["cb"].astype(jnp.float32)                        # (1, F)
    if Fp != F:
        pf = Fp - F
        x_flat = jnp.pad(x_flat, ((0, 0), (0, pf)))
        wg = jnp.pad(wg, ((0, 0), (0, pf)))
        wb = jnp.pad(wb, ((0, 0), (0, pf)))
        cw = jnp.pad(cw, ((0, 0), (0, pf), (0, pf)))
        cb = jnp.pad(cb, ((0, 0), (0, pf)))
    cwf = cw.reshape(K * Fp, Fp)                                 # tap-major conv weight

    itemsize = jnp.dtype(x.dtype).itemsize
    cost = pl.CostEstimate(
        flops=int(2 * B * T * (2 * Fe * Fp + K * Fp * Fp) + 10 * B * T * Fp),
        transcendentals=int(B * T * (Fe + Fp)),
        bytes_accessed=int(x_flat.size * x_flat.dtype.itemsize + time_col.size * 4
                           + B * T * Fp * itemsize
                           + (wg.size + wb.size + cwf.size) * 2
                           + (3 * Fe + cb.size) * 4),
    )

    # TODO(synk): for very long T, tile the sequence with a (K-1)-row halo (or a
    # carried VMEM tail) instead of whole-batch blocks, and raise
    # vmem_limit_bytes via pltpu.CompilerParams when a larger R is wanted.
    kernel = functools.partial(timefilm_kernel, T=T, K=K, F=Fp)

    def run(single_buffer_weights):
        def const_spec(a):
            # Constant weights: single-buffer (never changes across the grid).
            kw = {"pipeline_mode": pl.Buffered(1)} if single_buffer_weights else {}
            return pl.BlockSpec(a.shape, lambda i: (0, 0), **kw)

        return pl.pallas_call(
            kernel,
            out_shape=jax.ShapeDtypeStruct((B * T, Fp), x.dtype),
            grid=grid,
            in_specs=[
                pl.BlockSpec((R, 1), lambda i: (i, 0)),       # time (R, 1)
                pl.BlockSpec((R, Fp), lambda i: (i, 0)),      # x    (R, Fp)
                const_spec(params["ws"]), const_spec(params["ph"]),
                const_spec(params["sc"]),
                const_spec(wg), const_spec(wb), const_spec(cwf), const_spec(cb),
            ],
            out_specs=pl.BlockSpec((R, Fp), lambda i: (i, 0)),
            compiler_params=pltpu.CompilerParams(
                dimension_semantics=("parallel",)),
            cost_estimate=cost,
        )(time_col, x_flat, params["ws"], params["ph"], params["sc"],
          wg, wb, cwf, cb)

    try:
        out_flat = run(True)
    except Exception:
        # Fallback for Pallas builds without pipeline_mode support; any other
        # genuine error will re-raise from the retry.
        out_flat = run(False)

    out = out_flat[:, :F] if Fp != F else out_flat
    return out.reshape(B, T, F)


# ----------------------- deterministic parameter init ---------------------- #
def make_params(key, input_dims, te_features, max_te_period, kernel_size,
                init_k_exp=0.5):
    """Mirrors TemporalEncoder.reset() / TimeFILM.reset() parameter shapes."""
    n = te_features // 2
    periods = np.repeat(
        np.array([max_te_period / (i + 1) for i in range(n)], dtype=np.float32), 2)
    ws = (2.0 * math.pi / periods).astype(np.float32)                       # (Fe,)
    phases = np.array([math.pi / 2 if i % 2 == 0 else 0.0
                       for i in range(2 * n)], dtype=np.float32)            # (Fe,)
    scales = np.array([math.exp(-math.floor(i / 2) * init_k_exp)
                       for i in range(2 * n)], dtype=np.float32)            # (Fe,)

    k1, k2, k3, k4 = jax.random.split(key, 4)
    # gamma_beta_f: Linear(te_features, input_dims, split_out=2, bias=False)
    wg = 0.1 * jax.random.normal(k1, (te_features, input_dims), jnp.float32)
    wb = 0.1 * jax.random.normal(k2, (te_features, input_dims), jnp.float32)
    # Conv1d(input_dims, input_dims, kernel_size, bias=True) weights stored as
    # (K, C_in, C_out) so tap k is a (T,F)@(F,F) matmul.
    fan_in = input_dims * kernel_size
    cw = (1.0 / math.sqrt(fan_in)) * jax.random.normal(
        k3, (kernel_size, input_dims, input_dims), jnp.float32)
    cb = (1.0 / math.sqrt(fan_in)) * jax.random.normal(
        k4, (1, input_dims), jnp.float32)

    return {
        "ws": jnp.asarray(ws)[None, :],        # (1, Fe)
        "ph": jnp.asarray(phases)[None, :],    # (1, Fe)
        "sc": jnp.asarray(scales)[None, :],    # (1, Fe)
        "wg": wg, "wb": wb, "cw": cw, "cb": cb,
    }


# ----------------------------- pure-JAX references -------------------------- #
def timefilm_reference(x, time, params):
    """Pure-f32 reference (matches the PyTorch module math)."""
    ws, ph, sc = params["ws"][0], params["ph"][0], params["sc"][0]
    te = sc[None, None] * jnp.sin(ws[None, None] * time[..., None] + ph[None, None])
    gamma = te @ params["wg"]
    beta = te @ params["wb"]
    x_mod = jnp.tanh(gamma) * x + beta
    K = params["cw"].shape[0]
    T = x.shape[1]
    xp = jnp.pad(x_mod, ((0, 0), (K - 1, 0), (0, 0)))
    acc = jnp.zeros_like(x_mod) + params["cb"][None]
    for k in range(K):
        acc = acc + xp[:, k:k + T, :] @ params["cw"][k]
    return jnp.maximum(acc, 0.0)


def timefilm_reference_mixed(x, time, params):
    """Reference mirroring the kernel's bf16-operand / f32-accumulation policy."""
    f32, bf16 = jnp.float32, jnp.bfloat16
    ws, ph, sc = params["ws"][0], params["ph"][0], params["sc"][0]
    te = sc[None, None] * jnp.sin(ws[None, None] * time[..., None] + ph[None, None])
    te_bf = te.astype(bf16)
    gamma = jnp.einsum("bte,ef->btf", te_bf, params["wg"].astype(bf16),
                       preferred_element_type=f32)
    beta = jnp.einsum("bte,ef->btf", te_bf, params["wb"].astype(bf16),
                      preferred_element_type=f32)
    x_mod = jnp.tanh(gamma) * x.astype(bf16).astype(f32) + beta
    K = params["cw"].shape[0]
    T = x.shape[1]
    xp = jnp.pad(x_mod, ((0, 0), (K - 1, 0), (0, 0)))
    acc = jnp.zeros_like(x_mod) + params["cb"][None]
    for k in range(K):
        acc = acc + jnp.einsum("btf,fg->btg", xp[:, k:k + T, :].astype(bf16),
                               params["cw"][k].astype(bf16),
                               preferred_element_type=f32)
    return jnp.maximum(acc, 0.0)


# ---------------------------------- main ------------------------------------ #
if __name__ == "__main__":
    B, T, F = 4, 8, 32            # batch, sequence length, input_dims
    Fe = 8                        # te_features (must be even, > 0)
    max_te_period = 100.0
    kernel_size = 3

    key = jax.random.PRNGKey(0)
    kx, kt, kp = jax.random.split(key, 3)
    x = jax.random.normal(kx, (B, T, F), jnp.float32)
    time = jnp.sort(jax.random.uniform(kt, (B, T), jnp.float32) * max_te_period, axis=1)
    onehot = jnp.ones((B, T), jnp.bool_)   # unused (padding_value=None)

    params = make_params(kp, F, Fe, max_te_period, kernel_size, init_k_exp=0.5)
    ref_f32 = timefilm_reference(x, time, params)
    ref_mix = timefilm_reference_mixed(x, time, params)

    # Default: auto block -> 2 batches per step, 2 "parallel" grid steps,
    # bf16 x transfer, fused-tap conv matmul (F=32 < 128).
    out = jax.block_until_ready(timefilm_forward(x, time, onehot, params))
    np.testing.assert_allclose(np.asarray(out), np.asarray(ref_mix), rtol=5e-3, atol=5e-3)
    np.testing.assert_allclose(np.asarray(out), np.asarray(ref_f32), rtol=5e-2, atol=5e-2)

    # One batch per grid step (grid of 4; exercises boundary masking / pipelining).
    out_b1 = jax.block_until_ready(
        timefilm_forward(x, time, onehot, params, batch_block=1))
    np.testing.assert_allclose(np.asarray(out_b1), np.asarray(ref_f32), rtol=5e-2, atol=5e-2)

    # Lane-padded path (F -> 128): exercises the K accumulating-dot conv variant
    # with lane-dense stores, as used for production 128-aligned feature dims.
    out_pad = jax.block_until_ready(
        timefilm_forward(x, time, onehot, params, pad_features=True))
    np.testing.assert_allclose(np.asarray(out_pad), np.asarray(ref_mix), rtol=5e-3, atol=5e-3)
    np.testing.assert_allclose(np.asarray(out_pad), np.asarray(ref_f32), rtol=5e-2, atol=5e-2)

    print("KERNEL_OK")
</pallas_src>

<mosaic_0001>
module attributes {stable_mosaic.version = 11 : i64} {
  func.func @timefilm_kernel(%arg0: i32, %arg1: memref<16x1xf32, #tpu.memory_space<vmem>>, %arg2: memref<16x32xbf16, #tpu.memory_space<vmem>>, %arg3: memref<1x8xf32, #tpu.memory_space<vmem>>, %arg4: memref<1x8xf32, #tpu.memory_space<vmem>>, %arg5: memref<1x8xf32, #tpu.memory_space<vmem>>, %arg6: memref<8x32xbf16, #tpu.memory_space<vmem>>, %arg7: memref<8x32xbf16, #tpu.memory_space<vmem>>, %arg8: memref<96x32xbf16, #tpu.memory_space<vmem>>, %arg9: memref<1x32xf32, #tpu.memory_space<vmem>>, %arg10: memref<16x32xf32, #tpu.memory_space<vmem>>) attributes {dimension_semantics = [#tpu.dimension_semantics<parallel>], iteration_bounds = array<i64: 2>, scalar_prefetch = 0 : i64, scratch_operands = 0 : i64, tpu.core_type = #tpu.core_type<tc>, window_params = [{transform_indices = @transform_0, window_bounds = array<i64: 16, 1>}, {transform_indices = @transform_1, window_bounds = array<i64: 16, 32>}, {pipeline_mode = #tpu.pipeline_mode<synchronous>, transform_indices = @transform_2, window_bounds = array<i64: 1, 8>}, {pipeline_mode = #tpu.pipeline_mode<synchronous>, transform_indices = @transform_3, window_bounds = array<i64: 1, 8>}, {pipeline_mode = #tpu.pipeline_mode<synchronous>, transform_indices = @transform_4, window_bounds = array<i64: 1, 8>}, {pipeline_mode = #tpu.pipeline_mode<synchronous>, transform_indices = @transform_5, window_bounds = array<i64: 8, 32>}, {pipeline_mode = #tpu.pipeline_mode<synchronous>, transform_indices = @transform_6, window_bounds = array<i64: 8, 32>}, {pipeline_mode = #tpu.pipeline_mode<synchronous>, transform_indices = @transform_7, window_bounds = array<i64: 96, 32>}, {pipeline_mode = #tpu.pipeline_mode<synchronous>, transform_indices = @transform_8, window_bounds = array<i64: 1, 32>}, {transform_indices = @transform_9, window_bounds = array<i64: 16, 32>}]} {
    %c0 = arith.constant 0 : index
    %c0_0 = arith.constant 0 : index
    %0 = vector.load %arg5[%c0, %c0_0] : memref<1x8xf32, #tpu.memory_space<vmem>>, vector<1x8xf32>
    %c0_1 = arith.constant 0 : index
    %c0_2 = arith.constant 0 : index
    %1 = vector.load %arg3[%c0_1, %c0_2] : memref<1x8xf32, #tpu.memory_space<vmem>>, vector<1x8xf32>
    %c0_3 = arith.constant 0 : index
    %c0_4 = arith.constant 0 : index
    %2 = vector.load %arg1[%c0_3, %c0_4] : memref<16x1xf32, #tpu.memory_space<vmem>>, vector<16x1xf32>
    %3 = vector.broadcast %1 : vector<1x8xf32> to vector<16x8xf32>
    %4 = vector.broadcast %2 : vector<16x1xf32> to vector<16x8xf32>
    %5 = arith.mulf %3, %4 : vector<16x8xf32>
    %c0_5 = arith.constant 0 : index
    %c0_6 = arith.constant 0 : index
    %6 = vector.load %arg4[%c0_5, %c0_6] : memref<1x8xf32, #tpu.memory_space<vmem>>, vector<1x8xf32>
    %7 = vector.broadcast %6 : vector<1x8xf32> to vector<16x8xf32>
    %8 = arith.addf %5, %7 : vector<16x8xf32>
    %9 = math.sin %8 : vector<16x8xf32>
    %10 = vector.broadcast %0 : vector<1x8xf32> to vector<16x8xf32>
    %11 = arith.mulf %10, %9 : vector<16x8xf32>
    %12 = arith.truncf %11 : vector<16x8xf32> to vector<16x8xbf16>
    %c0_7 = arith.constant 0 : index
    %c0_8 = arith.constant 0 : index
    %13 = vector.load %arg6[%c0_7, %c0_8] : memref<8x32xbf16, #tpu.memory_space<vmem>>, vector<8x32xbf16>
    %cst = arith.constant dense<0.000000e+00> : vector<16x32xf32>
    %14 = tpu.matmul %12, %13, %cst {dimension_numbers = #tpu.dot_dimension_numbers<[1], [0], [0], [1], [0, 0, 1, 1], [], []>} : vector<16x8xbf16>, vector<8x32xbf16>, vector<16x32xf32> -> vector<16x32xf32>
    %c0_9 = arith.constant 0 : index
    %c0_10 = arith.constant 0 : index
    %15 = vector.load %arg7[%c0_9, %c0_10] : memref<8x32xbf16, #tpu.memory_space<vmem>>, vector<8x32xbf16>
    %cst_11 = arith.constant dense<0.000000e+00> : vector<16x32xf32>
    %16 = tpu.matmul %12, %15, %cst_11 {dimension_numbers = #tpu.dot_dimension_numbers<[1], [0], [0], [1], [0, 0, 1, 1], [], []>} : vector<16x8xbf16>, vector<8x32xbf16>, vector<16x32xf32> -> vector<16x32xf32>
    %17 = math.tanh %14 : vector<16x32xf32>
    %c0_12 = arith.constant 0 : index
    %c0_13 = arith.constant 0 : index
    %18 = vector.load %arg2[%c0_12, %c0_13] : memref<16x32xbf16, #tpu.memory_space<vmem>>, vector<16x32xbf16>
    %19 = arith.extf %18 : vector<16x32xbf16> to vector<16x32xf32>
    %20 = arith.mulf %17, %19 : vector<16x32xf32>
    %21 = arith.addf %20, %16 : vector<16x32xf32>
    %22 = tpu.iota {dimensions = array<i32: 0>} : vector<16x1xi32>
    %c8_i32 = arith.constant 8 : i32
    %c0_i32 = arith.constant 0 : i32
    %23 = arith.cmpi eq, %c8_i32, %c0_i32 : i32
    %c1_i32 = arith.constant 1 : i32
    %24 = arith.select %23, %c1_i32, %c8_i32 : i32
    %25 = vector.broadcast %24 : i32 to vector<16x1xi32>
    %26 = arith.remsi %22, %25 : vector<16x1xi32>
    %c0_i32_14 = arith.constant 0 : i32
    %27 = vector.broadcast %c0_i32_14 : i32 to vector<16x1xi32>
    %28 = arith.cmpi ne, %26, %27 : vector<16x1xi32>
    %c0_i32_15 = arith.constant 0 : i32
    %29 = vector.broadcast %c0_i32_15 : i32 to vector<16x1xi32>
    %30 = arith.cmpi slt, %26, %29 : vector<16x1xi32>
    %c0_i32_16 = arith.constant 0 : i32
    %31 = arith.cmpi slt, %24, %c0_i32_16 : i32
    %32 = vector.broadcast %31 : i1 to vector<16x1xi1>
    %33 = vector.broadcast %32 : vector<16x1xi1> to vector<16x1xi1>
    %34 = arith.xori %30, %33 : vector<16x1xi1>
    %35 = arith.andi %34, %28 : vector<16x1xi1>
    %36 = vector.broadcast %24 : i32 to vector<16x1xi32>
    %37 = arith.addi %26, %36 : vector<16x1xi32>
    %38 = arith.select %35, %37, %26 : vector<16x1xi1>, vector<16x1xi32>
    %39 = vector.extract_strided_slice %21 {offsets = [14, 0], sizes = [2, 32], strides = [1, 1]} : vector<16x32xf32> to vector<2x32xf32>
    %40 = vector.extract_strided_slice %21 {offsets = [0, 0], sizes = [14, 32], strides = [1, 1]} : vector<16x32xf32> to vector<14x32xf32>
    %41 = tpu.concatenate %39, %40 in 0 : vector<2x32xf32>, vector<14x32xf32> -> vector<16x32xf32>
    %c2_i32 = arith.constant 2 : i32
    %42 = vector.broadcast %c2_i32 : i32 to vector<16x1xi32>
    %43 = arith.cmpi sge, %38, %42 : vector<16x1xi32>
    %cst_17 = arith.constant 0.000000e+00 : f32
    %44 = vector.shape_cast %43 : vector<16x1xi1> to vector<16x1xi1>
    %45 = vector.broadcast %44 : vector<16x1xi1> to vector<16x32xi1>
    %46 = vector.broadcast %cst_17 : f32 to vector<16x32xf32>
    %47 = arith.select %45, %41, %46 : vector<16x32xi1>, vector<16x32xf32>
    %48 = vector.extract_strided_slice %21 {offsets = [15, 0], sizes = [1, 32], strides = [1, 1]} : vector<16x32xf32> to vector<1x32xf32>
    %49 = vector.extract_strided_slice %21 {offsets = [0, 0], sizes = [15, 32], strides = [1, 1]} : vector<16x32xf32> to vector<15x32xf32>
    %50 = tpu.concatenate %48, %49 in 0 : vector<1x32xf32>, vector<15x32xf32> -> vector<16x32xf32>
    %c1_i32_18 = arith.constant 1 : i32
    %51 = vector.broadcast %c1_i32_18 : i32 to vector<16x1xi32>
    %52 = arith.cmpi sge, %38, %51 : vector<16x1xi32>
    %cst_19 = arith.constant 0.000000e+00 : f32
    %53 = vector.shape_cast %52 : vector<16x1xi1> to vector<16x1xi1>
    %54 = vector.broadcast %53 : vector<16x1xi1> to vector<16x32xi1>
    %55 = vector.broadcast %cst_19 : f32 to vector<16x32xf32>
    %56 = arith.select %54, %50, %55 : vector<16x32xi1>, vector<16x32xf32>
    %57 = tpu.concatenate %47, %56, %21 in 1 : vector<16x32xf32>, vector<16x32xf32>, vector<16x32xf32> -> vector<16x96xf32>
    %58 = arith.truncf %57 : vector<16x96xf32> to vector<16x96xbf16>
    %c0_20 = arith.constant 0 : index
    %c0_21 = arith.constant 0 : index
    %59 = vector.load %arg8[%c0_20, %c0_21] : memref<96x32xbf16, #tpu.memory_space<vmem>>, vector<96x32xbf16>
    %cst_22 = arith.constant dense<0.000000e+00> : vector<16x32xf32>
    %60 = tpu.matmul %58, %59, %cst_22 {dimension_numbers = #tpu.dot_dimension_numbers<[1], [0], [0], [1], [0, 0, 1, 1], [], []>} : vector<16x96xbf16>, vector<96x32xbf16>, vector<16x32xf32> -> vector<16x32xf32>
    %c0_23 = arith.constant 0 : index
    %c0_24 = arith.constant 0 : index
    %61 = vector.load %arg9[%c0_23, %c0_24] : memref<1x32xf32, #tpu.memory_space<vmem>>, vector<1x32xf32>
    %62 = vector.broadcast %61 : vector<1x32xf32> to vector<16x32xf32>
    %63 = arith.addf %60, %62 : vector<16x32xf32>
    %cst_25 = arith.constant 0.000000e+00 : f32
    %64 = vector.broadcast %cst_25 : f32 to vector<16x32xf32>
    %65 = arith.maximumf %63, %64 : vector<16x32xf32>
    %c0_26 = arith.constant 0 : index
    %c0_27 = arith.constant 0 : index
    %66 = vector.load %arg10[%c0_26, %c0_27] : memref<16x32xf32, #tpu.memory_space<vmem>>, vector<16x32xf32>
    tpu.vector_store %arg10[%c0_26, %c0_27], %65 {strides = array<i32>} : memref<16x32xf32, #tpu.memory_space<vmem>>, vector<16x32xf32>,
    return
  }
  func.func @transform_0(%arg0: i32) -> (i32, i32) {
    %c0_i32 = arith.constant 0 : i32
    %c0_i32_0 = arith.constant 0 : i32
    return %arg0, %c0_i32 : i32, i32
  }
  func.func @transform_1(%arg0: i32) -> (i32, i32) {
    %c0_i32 = arith.constant 0 : i32
    %c0_i32_0 = arith.constant 0 : i32
    return %arg0, %c0_i32 : i32, i32
  }
  func.func @transform_2(%arg0: i32) -> (i32, i32) {
    %c0_i32 = arith.constant 0 : i32
    %c0_i32_0 = arith.constant 0 : i32
    %c0_i32_1 = arith.constant 0 : i32
    return %c0_i32, %c0_i32_0 : i32, i32
  }
  func.func @transform_3(%arg0: i32) -> (i32, i32) {
    %c0_i32 = arith.constant 0 : i32
    %c0_i32_0 = arith.constant 0 : i32
    %c0_i32_1 = arith.constant 0 : i32
    return %c0_i32, %c0_i32_0 : i32, i32
  }
  func.func @transform_4(%arg0: i32) -> (i32, i32) {
    %c0_i32 = arith.constant 0 : i32
    %c0_i32_0 = arith.constant 0 : i32
    %c0_i32_1 = arith.constant 0 : i32
    return %c0_i32, %c0_i32_0 : i32, i32
  }
  func.func @transform_5(%arg0: i32) -> (i32, i32) {
    %c0_i32 = arith.constant 0 : i32
    %c0_i32_0 = arith.constant 0 : i32
    %c0_i32_1 = arith.constant 0 : i32
    return %c0_i32, %c0_i32_0 : i32, i32
  }
  func.func @transform_6(%arg0: i32) -> (i32, i32) {
    %c0_i32 = arith.constant 0 : i32
    %c0_i32_0 = arith.constant 0 : i32
    %c0_i32_1 = arith.constant 0 : i32
    return %c0_i32, %c0_i32_0 : i32, i32
  }
  func.func @transform_7(%arg0: i32) -> (i32, i32) {
    %c0_i32 = arith.constant 0 : i32
    %c0_i32_0 = arith.constant 0 : i32
    %c0_i32_1 = arith.constant 0 : i32
    return %c0_i32, %c0_i32_0 : i32, i32
  }
  func.func @transform_8(%arg0: i32) -> (i32, i32) {
    %c0_i32 = arith.constant 0 : i32
    %c0_i32_0 = arith.constant 0 : i32
    %c0_i32_1 = arith.constant 0 : i32
    return %c0_i32, %c0_i32_0 : i32, i32
  }
  func.func @transform_9(%arg0: i32) -> (i32, i32) {
    %c0_i32 = arith.constant 0 : i32
    %c0_i32_0 = arith.constant 0 : i32
    return %arg0, %c0_i32 : i32, i32
  }
}

module attributes {stable_mosaic.version = 11 : i64} {
  func.func @timefilm_kernel(%arg0: i32, %arg1: memref<16x1xf32, #tpu.memory_space<vmem>>, %arg2: memref<16x32xbf16, #tpu.memory_space<vmem>>, %arg3: memref<1x8xf32, #tpu.memory_space<vmem>>, %arg4: memref<1x8xf32, #tpu.memory_space<vmem>>, %arg5: memref<1x8xf32, #tpu.memory_space<vmem>>, %arg6: memref<8x32xbf16, #tpu.memory_space<vmem>>, %arg7: memref<8x32xbf16, #tpu.memory_space<vmem>>, %arg8: memref<96x32xbf16, #tpu.memory_space<vmem>>, %arg9: memref<1x32xf32, #tpu.memory_space<vmem>>, %arg10: memref<16x32xf32, #tpu.memory_space<vmem>>) attributes {dimension_semantics = [#tpu.dimension_semantics<parallel>], iteration_bounds = array<i64: 2>, scalar_prefetch = 0 : i64, scratch_operands = 0 : i64, tpu.core_type = #tpu.core_type<tc>, window_params = [{transform_indices = @transform_0, window_bounds = array<i64: 16, 1>}, {transform_indices = @transform_1, window_bounds = array<i64: 16, 32>}, {pipeline_mode = #tpu.pipeline_mode<synchronous>, transform_indices = @transform_2, window_bounds = array<i64: 1, 8>}, {pipeline_mode = #tpu.pipeline_mode<synchronous>, transform_indices = @transform_3, window_bounds = array<i64: 1, 8>}, {pipeline_mode = #tpu.pipeline_mode<synchronous>, transform_indices = @transform_4, window_bounds = array<i64: 1, 8>}, {pipeline_mode = #tpu.pipeline_mode<synchronous>, transform_indices = @transform_5, window_bounds = array<i64: 8, 32>}, {pipeline_mode = #tpu.pipeline_mode<synchronous>, transform_indices = @transform_6, window_bounds = array<i64: 8, 32>}, {pipeline_mode = #tpu.pipeline_mode<synchronous>, transform_indices = @transform_7, window_bounds = array<i64: 96, 32>}, {pipeline_mode = #tpu.pipeline_mode<synchronous>, transform_indices = @transform_8, window_bounds = array<i64: 1, 32>}, {transform_indices = @transform_9, window_bounds = array<i64: 16, 32>}]} {
    %c0 = arith.constant 0 : index
    %c0_0 = arith.constant 0 : index
    %0 = vector.load %arg5[%c0, %c0_0] : memref<1x8xf32, #tpu.memory_space<vmem>>, vector<1x8xf32>
    %c0_1 = arith.constant 0 : index
    %c0_2 = arith.constant 0 : index
    %1 = vector.load %arg3[%c0_1, %c0_2] : memref<1x8xf32, #tpu.memory_space<vmem>>, vector<1x8xf32>
    %c0_3 = arith.constant 0 : index
    %c0_4 = arith.constant 0 : index
    %2 = vector.load %arg1[%c0_3, %c0_4] : memref<16x1xf32, #tpu.memory_space<vmem>>, vector<16x1xf32>
    %3 = vector.broadcast %1 : vector<1x8xf32> to vector<16x8xf32>
    %4 = vector.broadcast %2 : vector<16x1xf32> to vector<16x8xf32>
    %5 = arith.mulf %3, %4 : vector<16x8xf32>
    %c0_5 = arith.constant 0 : index
    %c0_6 = arith.constant 0 : index
    %6 = vector.load %arg4[%c0_5, %c0_6] : memref<1x8xf32, #tpu.memory_space<vmem>>, vector<1x8xf32>
    %7 = vector.broadcast %6 : vector<1x8xf32> to vector<16x8xf32>
    %8 = arith.addf %5, %7 : vector<16x8xf32>
    %9 = math.sin %8 : vector<16x8xf32>
    %10 = vector.broadcast %0 : vector<1x8xf32> to vector<16x8xf32>
    %11 = arith.mulf %10, %9 : vector<16x8xf32>
    %12 = arith.truncf %11 : vector<16x8xf32> to vector<16x8xbf16>
    %c0_7 = arith.constant 0 : index
    %c0_8 = arith.constant 0 : index
    %13 = vector.load %arg6[%c0_7, %c0_8] : memref<8x32xbf16, #tpu.memory_space<vmem>>, vector<8x32xbf16>
    %cst = arith.constant dense<0.000000e+00> : vector<16x32xf32>
    %14 = tpu.matmul %12, %13, %cst {dimension_numbers = #tpu.dot_dimension_numbers<[1], [0], [0], [1], [0, 0, 1, 1], [], []>} : vector<16x8xbf16>, vector<8x32xbf16>, vector<16x32xf32> -> vector<16x32xf32>
    %c0_9 = arith.constant 0 : index
    %c0_10 = arith.constant 0 : index
    %15 = vector.load %arg7[%c0_9, %c0_10] : memref<8x32xbf16, #tpu.memory_space<vmem>>, vector<8x32xbf16>
    %cst_11 = arith.constant dense<0.000000e+00> : vector<16x32xf32>
    %16 = tpu.matmul %12, %15, %cst_11 {dimension_numbers = #tpu.dot_dimension_numbers<[1], [0], [0], [1], [0, 0, 1, 1], [], []>} : vector<16x8xbf16>, vector<8x32xbf16>, vector<16x32xf32> -> vector<16x32xf32>
    %17 = math.tanh %14 : vector<16x32xf32>
    %c0_12 = arith.constant 0 : index
    %c0_13 = arith.constant 0 : index
    %18 = vector.load %arg2[%c0_12, %c0_13] : memref<16x32xbf16, #tpu.memory_space<vmem>>, vector<16x32xbf16>
    %19 = arith.extf %18 : vector<16x32xbf16> to vector<16x32xf32>
    %20 = arith.mulf %17, %19 : vector<16x32xf32>
    %21 = arith.addf %20, %16 : vector<16x32xf32>
    %22 = tpu.iota {dimensions = array<i32: 0>} : vector<16x1xi32>
    %c8_i32 = arith.constant 8 : i32
    %c0_i32 = arith.constant 0 : i32
    %23 = arith.cmpi eq, %c8_i32, %c0_i32 : i32
    %c1_i32 = arith.constant 1 : i32
    %24 = arith.select %23, %c1_i32, %c8_i32 : i32
    %25 = vector.broadcast %24 : i32 to vector<16x1xi32>
    %26 = arith.remsi %22, %25 : vector<16x1xi32>
    %c0_i32_14 = arith.constant 0 : i32
    %27 = vector.broadcast %c0_i32_14 : i32 to vector<16x1xi32>
    %28 = arith.cmpi ne, %26, %27 : vector<16x1xi32>
    %c0_i32_15 = arith.constant 0 : i32
    %29 = vector.broadcast %c0_i32_15 : i32 to vector<16x1xi32>
    %30 = arith.cmpi slt, %26, %29 : vector<16x1xi32>
    %c0_i32_16 = arith.constant 0 : i32
    %31 = arith.cmpi slt, %24, %c0_i32_16 : i32
    %32 = vector.broadcast %31 : i1 to vector<16x1xi1>
    %33 = vector.broadcast %32 : vector<16x1xi1> to vector<16x1xi1>
    %34 = arith.xori %30, %33 : vector<16x1xi1>
    %35 = arith.andi %34, %28 : vector<16x1xi1>
    %36 = vector.broadcast %24 : i32 to vector<16x1xi32>
    %37 = arith.addi %26, %36 : vector<16x1xi32>
    %38 = arith.select %35, %37, %26 : vector<16x1xi1>, vector<16x1xi32>
    %39 = vector.extract_strided_slice %21 {offsets = [14, 0], sizes = [2, 32], strides = [1, 1]} : vector<16x32xf32> to vector<2x32xf32>
    %40 = vector.extract_strided_slice %21 {offsets = [0, 0], sizes = [14, 32], strides = [1, 1]} : vector<16x32xf32> to vector<14x32xf32>
    %41 = tpu.concatenate %39, %40 in 0 : vector<2x32xf32>, vector<14x32xf32> -> vector<16x32xf32>
    %c2_i32 = arith.constant 2 : i32
    %42 = vector.broadcast %c2_i32 : i32 to vector<16x1xi32>
    %43 = arith.cmpi sge, %38, %42 : vector<16x1xi32>
    %cst_17 = arith.constant 0.000000e+00 : f32
    %44 = vector.shape_cast %43 : vector<16x1xi1> to vector<16x1xi1>
    %45 = vector.broadcast %44 : vector<16x1xi1> to vector<16x32xi1>
    %46 = vector.broadcast %cst_17 : f32 to vector<16x32xf32>
    %47 = arith.select %45, %41, %46 : vector<16x32xi1>, vector<16x32xf32>
    %48 = vector.extract_strided_slice %21 {offsets = [15, 0], sizes = [1, 32], strides = [1, 1]} : vector<16x32xf32> to vector<1x32xf32>
    %49 = vector.extract_strided_slice %21 {offsets = [0, 0], sizes = [15, 32], strides = [1, 1]} : vector<16x32xf32> to vector<15x32xf32>
    %50 = tpu.concatenate %48, %49 in 0 : vector<1x32xf32>, vector<15x32xf32> -> vector<16x32xf32>
    %c1_i32_18 = arith.constant 1 : i32
    %51 = vector.broadcast %c1_i32_18 : i32 to vector<16x1xi32>
    %52 = arith.cmpi sge, %38, %51 : vector<16x1xi32>
    %cst_19 = arith.constant 0.000000e+00 : f32
    %53 = vector.shape_cast %52 : vector<16x1xi1> to vector<16x1xi1>
    %54 = vector.broadcast %53 : vector<16x1xi1> to vector<16x32xi1>
    %55 = vector.broadcast %cst_19 : f32 to vector<16x32xf32>
    %56 = arith.select %54, %50, %55 : vector<16x32xi1>, vector<16x32xf32>
    %57 = tpu.concatenate %47, %56, %21 in 1 : vector<16x32xf32>, vector<16x32xf32>, vector<16x32xf32> -> vector<16x96xf32>
    %58 = arith.truncf %57 : vector<16x96xf32> to vector<16x96xbf16>
    %c0_20 = arith.constant 0 : index
    %c0_21 = arith.constant 0 : index
    %59 = vector.load %arg8[%c0_20, %c0_21] : memref<96x32xbf16, #tpu.memory_space<vmem>>, vector<96x32xbf16>
    %cst_22 = arith.constant dense<0.000000e+00> : vector<16x32xf32>
    %60 = tpu.matmul %58, %59, %cst_22 {dimension_numbers = #tpu.dot_dimension_numbers<[1], [0], [0], [1], [0, 0, 1, 1], [], []>} : vector<16x96xbf16>, vector<96x32xbf16>, vector<16x32xf32> -> vector<16x32xf32>
    %c0_23 = arith.constant 0 : index
    %c0_24 = arith.constant 0 : index
    %61 = vector.load %arg9[%c0_23, %c0_24] : memref<1x32xf32, #tpu.memory_space<vmem>>, vector<1x32xf32>
    %62 = vector.broadcast %61 : vector<1x32xf32> to vector<16x32xf32>
    %63 = arith.addf %60, %62 : vector<16x32xf32>
    %cst_25 = arith.constant 0.000000e+00 : f32
    %64 = vector.broadcast %cst_25 : f32 to vector<16x32xf32>
    %65 = arith.maximumf %63, %64 : vector<16x32xf32>
    %c0_26 = arith.constant 0 : index
    %c0_27 = arith.constant 0 : index
    %66 = vector.load %arg10[%c0_26, %c0_27] : memref<16x32xf32, #tpu.memory_space<vmem>>, vector<16x32xf32>
    tpu.vector_store %arg10[%c0_26, %c0_27], %65 {strides = array<i32>} : memref<16x32xf32, #tpu.memory_space<vmem>>, vector<16x32xf32>,
    return
  }
  func.func @transform_0(%arg0: i32) -> (i32, i32) {
    %c0_i32 = arith.constant 0 : i32
    %c0_i32_0 = arith.constant 0 : i32
    return %arg0, %c0_i32 : i32, i32
  }
  func.func @transform_1(%arg0: i32) -> (i32, i32) {
    %c0_i32 = arith.constant 0 : i32
    %c0_i32_0 = arith.constant 0 : i32
    return %arg0, %c0_i32 : i32, i32
  }
  func.func @transform_2(%arg0: i32) -> (i32, i32) {
    %c0_i32 = arith.constant 0 : i32
    %c0_i32_0 = arith.constant 0 : i32
    %c0_i32_1 = arith.constant 0 : i32
    return %c0_i32, %c0_i32_0 : i32, i32
  }
  func.func @transform_3(%arg0: i32) -> (i32, i32) {
    %c0_i32 = arith.constant 0 : i32
    %c0_i32_0 = arith.constant 0 : i32
    %c0_i32_1 = arith.constant 0 : i32
    return %c0_i32, %c0_i32_0 : i32, i32
  }
  func.func @transform_4(%arg0: i32) -> (i32, i32) {
    %c0_i32 = arith.constant 0 : i32
    %c0_i32_0 = arith.constant 0 : i32
    %c0_i32_1 = arith.constant 0 : i32
    return %c0_i32, %c0_i32_0 : i32, i32
  }
  func.func @transform_5(%arg0: i32) -> (i32, i32) {
    %c0_i32 = arith.constant 0 : i32
    %c0_i32_0 = arith.constant 0 : i32
    %c0_i32_1 = arith.constant 0 : i32
    return %c0_i32, %c0_i32_0 : i32, i32
  }
  func.func @transform_6(%arg0: i32) -> (i32, i32) {
    %c0_i32 = arith.constant 0 : i32
    %c0_i32_0 = arith.constant 0 : i32
    %c0_i32_1 = arith.constant 0 : i32
    return %c0_i32, %c0_i32_0 : i32, i32
  }
  func.func @transform_7(%arg0: i32) -> (i32, i32) {
    %c0_i32 = arith.constant 0 : i32
    %c0_i32_0 = arith.constant 0 : i32
    %c0_i32_1 = arith.constant 0 : i32
    return %c0_i32, %c0_i32_0 : i32, i32
  }
  func.func @transform_8(%arg0: i32) -> (i32, i32) {
    %c0_i32 = arith.constant 0 : i32
    %c0_i32_0 = arith.constant 0 : i32
    %c0_i32_1 = arith.constant 0 : i32
    return %c0_i32, %c0_i32_0 : i32, i32
  }
  func.func @transform_9(%arg0: i32) -> (i32, i32) {
    %c0_i32 = arith.constant 0 : i32
    %c0_i32_0 = arith.constant 0 : i32
    return %arg0, %c0_i32 : i32, i32
  }
}

</mosaic_0001>

<llo_original>
// kernel: tpu_custom_call.1
$region0: #{tpu_custom_call.1}
  #allocation0 [shape = 'u32[]', space=smem, size = 0x4, offset = 0x4, fixed_abs, tag = 'smem constant byte address 0x4 - core index']
  #allocation1 [shape = 'u32[144,128]{1,0:T(1,128)}', space=vmem, size = 0x12000, scoped, tag = 'internal scratch']
  %s0 = inlined_call_operand.vmem [shape: f32[32,1], index: 0, kind: input, shape index: {}]
  %s1 = inlined_call_operand.vmem [shape: bf16[32,32], index: 1, kind: input, shape index: {}]
  %s2 = inlined_call_operand.vmem [shape: f32[1,8], index: 2, kind: input, shape index: {}]
  %s3 = inlined_call_operand.vmem [shape: f32[1,8], index: 3, kind: input, shape index: {}]
  %s4 = inlined_call_operand.vmem [shape: f32[1,8], index: 4, kind: input, shape index: {}]
  %s5 = inlined_call_operand.vmem [shape: bf16[8,32], index: 5, kind: input, shape index: {}]
  %s6 = inlined_call_operand.vmem [shape: bf16[8,32], index: 6, kind: input, shape index: {}]
  %s7 = inlined_call_operand.vmem [shape: bf16[96,32], index: 7, kind: input, shape index: {}]
  %s8 = inlined_call_operand.vmem [shape: f32[1,32], index: 8, kind: input, shape index: {}]
  %s9 = inlined_call_operand.hbm [shape: f32[32,32], index: 9, kind: output, shape index: {}]
  %s10 = sld [smem:[#allocation0]]
  $region69: #{tpu_custom_call.1} parent=0
    _
  %s12 = ssub.s32 1, %s10
  %s13 = scalar_select 0, %s12, %s10
  $region1: #{tpu_custom_call.1} parent=0
    #allocation2 [shape = 'u8[16384]{0}', space=vmem, size = 0x4000, scoped, tag = 'output window, operand 0']
    #allocation3 [shape = 's32[2]{0}', space=sflag, size = 0x8, scoped, tag = 'scoped memory for tpu_custom_call.1']
    %14 = vsyncpa [#allocation3], 0
    %s15 = scalar_lea.sflag [#allocation3], 1
    %16 = vsyncpa %s15, 0
    loop: start=0, step=1, limit=4
    $region2: #{tpu_custom_call.1} parent=1 // loop_pre_header
      _
    $region3: #{tpu_custom_call.1} parent=1 // loop_header
      %s18 = sphi 0, %s22
      %p19 = scmp.ge.s32.totalorder %s18, 4
      %s28 = sphi 0, %s30
      %s31 = sphi 0, %s28
      %s32 = sphi 0, %s31
      %s48 = sphi 0, %s32
      %s54 = sphi 0, %s56
      %s57 = sphi 0, %s54
      %s58 = sphi 0, %s57
      %s74 = sphi 0, %s58
      %s78 = sphi 0, %s78
      %s80 = sphi 0, %s78
      %s81 = sphi 0, %s80
      %s95 = sphi 0, %s81
      %s99 = sphi 0, %s99
      %s101 = sphi 0, %s99
      %s102 = sphi 0, %s101
      %s116 = sphi 0, %s102
      %s120 = sphi 0, %s120
      %s122 = sphi 0, %s120
      %s123 = sphi 0, %s122
      %s137 = sphi 0, %s123
      %s141 = sphi 0, %s141
      %s143 = sphi 0, %s141
      %s144 = sphi 0, %s143
      %s158 = sphi 0, %s144
      %s162 = sphi 0, %s162
      %s164 = sphi 0, %s162
      %s165 = sphi 0, %s164
      %s179 = sphi 0, %s165
      %s183 = sphi 0, %s183
      %s185 = sphi 0, %s183
      %s186 = sphi 0, %s185
      %s200 = sphi 0, %s186
      %s204 = sphi 0, %s204
      %s206 = sphi 0, %s204
      %s207 = sphi 0, %s206
      %s221 = sphi 0, %s207
      %s227 = sphi 0, %s229
      %s230 = sphi 0, %s227
      %s231 = sphi 0, %s230
      %s247 = sphi 0, %s231
    $region4: #{tpu_custom_call.1} parent=1 // loop_header_branch
      %21 = sbr.rel (%p19) target = $region8
    $region5: #{tpu_custom_call.1} parent=1 // loop_body
      %s23 = ssub.s32 %s18, 1
      %s24 = ssub.s32 %s18, 2
      %s25 = sadd.s32 %s18, 1
      %s26 = ssub.s32 %s18, %s25
      %p27 = scmp.eq.s32.totalorder %s26, 0
      %s29 = sadd.s32 %s28, 1
      %s30 = scalar_select %p27, %s28, %s29
      %p33 = pneg %p27
      %p34 = scmp.eq.s32.totalorder %s18, 1
      %p35 = por %p33, %p34
      %p36 = scmp.ne.s32.totalorder %s28, %s31
      %p37 = scmp.eq.s32.totalorder %s18, 0
      %p38 = por %p36, %p37
      %p39 = scmp.ne.s32.totalorder %s28, %s31
      %p40 = scmp.eq.s32.totalorder %s23, 1
      %p41 = por %p39, %p40
      %p42 = scmp.ne.s32.totalorder %s31, %s32
      %p43 = scmp.eq.s32.totalorder %s23, 0
      %p44 = por %p42, %p43
      %p45 = scmp.ne.s32.totalorder %s31, %s32
      %p46 = scmp.eq.s32.totalorder %s24, 1
      %p47 = por %p45, %p46
      %p49 = scmp.ne.s32.totalorder %s32, %s48
      %p50 = scmp.eq.s32.totalorder %s24, 0
      %p51 = por %p49, %p50
      %s52 = ssub.s32 %s18, %s25
      %p53 = scmp.eq.s32.totalorder %s52, 0
      %s55 = sadd.s32 %s54, 1
      %s56 = scalar_select %p53, %s54, %s55
      %p59 = pneg %p53
      %p60 = scmp.eq.s32.totalorder %s18, 1
      %p61 = por %p59, %p60
      %p62 = scmp.ne.s32.totalorder %s54, %s57
      %p63 = scmp.eq.s32.totalorder %s18, 0
      %p64 = por %p62, %p63
      %p65 = scmp.ne.s32.totalorder %s54, %s57
      %p66 = scmp.eq.s32.totalorder %s23, 1
      %p67 = por %p65, %p66
      %p68 = scmp.ne.s32.totalorder %s57, %s58
      %p69 = scmp.eq.s32.totalorder %s23, 0
      %p70 = por %p68, %p69
      %p71 = scmp.ne.s32.totalorder %s57, %s58
      %p72 = scmp.eq.s32.totalorder %s24, 1
      %p73 = por %p71, %p72
      %p75 = scmp.ne.s32.totalorder %s58, %s74
      %p76 = scmp.eq.s32.totalorder %s24, 0
      %p77 = por %p75, %p76
      %s79 = sadd.s32 %s78, 1
      %p82 = scmp.eq.s32.totalorder %s18, 1
      %p83 = scmp.ne.s32.totalorder %s78, %s80
      %p84 = scmp.eq.s32.totalorder %s18, 0
      %p85 = por %p83, %p84
      %p86 = scmp.ne.s32.totalorder %s78, %s80
      %p87 = scmp.eq.s32.totalorder %s23, 1
      %p88 = por %p86, %p87
      %p89 = scmp.ne.s32.totalorder %s80, %s81
      %p90 = scmp.eq.s32.totalorder %s23, 0
      %p91 = por %p89, %p90
      %p92 = scmp.ne.s32.totalorder %s80, %s81
      %p93 = scmp.eq.s32.totalorder %s24, 1
      %p94 = por %p92, %p93
      %p96 = scmp.ne.s32.totalorder %s81, %s95
      %p97 = scmp.eq.s32.totalorder %s24, 0
      %p98 = por %p96, %p97
      %s100 = sadd.s32 %s99, 1
      %p103 = scmp.eq.s32.totalorder %s18, 1
      %p104 = scmp.ne.s32.totalorder %s99, %s101
      %p105 = scmp.eq.s32.totalorder %s18, 0
      %p106 = por %p104, %p105
      %p107 = scmp.ne.s32.totalorder %s99, %s101
      %p108 = scmp.eq.s32.totalorder %s23, 1
      %p109 = por %p107, %p108
      %p110 = scmp.ne.s32.totalorder %s101, %s102
      %p111 = scmp.eq.s32.totalorder %s23, 0
      %p112 = por %p110, %p111
      %p113 = scmp.ne.s32.totalorder %s101, %s102
      %p114 = scmp.eq.s32.totalorder %s24, 1
      %p115 = por %p113, %p114
      %p117 = scmp.ne.s32.totalorder %s102, %s116
      %p118 = scmp.eq.s32.totalorder %s24, 0
      %p119 = por %p117, %p118
      %s121 = sadd.s32 %s120, 1
      %p124 = scmp.eq.s32.totalorder %s18, 1
      %p125 = scmp.ne.s32.totalorder %s120, %s122
      %p126 = scmp.eq.s32.totalorder %s18, 0
      %p127 = por %p125, %p126
      %p128 = scmp.ne.s32.totalorder %s120, %s122
      %p129 = scmp.eq.s32.totalorder %s23, 1
      %p130 = por %p128, %p129
      %p131 = scmp.ne.s32.totalorder %s122, %s123
      %p132 = scmp.eq.s32.totalorder %s23, 0
      %p133 = por %p131, %p132
      %p134 = scmp.ne.s32.totalorder %s122, %s123
      %p135 = scmp.eq.s32.totalorder %s24, 1
      %p136 = por %p134, %p135
      %p138 = scmp.ne.s32.totalorder %s123, %s137
      %p139 = scmp.eq.s32.totalorder %s24, 0
      %p140 = por %p138, %p139
      %s142 = sadd.s32 %s141, 1
      %p145 = scmp.eq.s32.totalorder %s18, 1
      %p146 = scmp.ne.s32.totalorder %s141, %s143
      %p147 = scmp.eq.s32.totalorder %s18, 0
      %p148 = por %p146, %p147
      %p149 = scmp.ne.s32.totalorder %s141, %s143
      %p150 = scmp.eq.s32.totalorder %s23, 1
      %p151 = por %p149, %p150
      %p152 = scmp.ne.s32.totalorder %s143, %s144
      %p153 = scmp.eq.s32.totalorder %s23, 0
      %p154 = por %p152, %p153
      %p155 = scmp.ne.s32.totalorder %s143, %s144
      %p156 = scmp.eq.s32.totalorder %s24, 1
      %p157 = por %p155, %p156
      %p159 = scmp.ne.s32.totalorder %s144, %s158
      %p160 = scmp.eq.s32.totalorder %s24, 0
      %p161 = por %p159, %p160
      %s163 = sadd.s32 %s162, 1
      %p166 = scmp.eq.s32.totalorder %s18, 1
      %p167 = scmp.ne.s32.totalorder %s162, %s164
      %p168 = scmp.eq.s32.totalorder %s18, 0
      %p169 = por %p167, %p168
      %p170 = scmp.ne.s32.totalorder %s162, %s164
      %p171 = scmp.eq.s32.totalorder %s23, 1
      %p172 = por %p170, %p171
      %p173 = scmp.ne.s32.totalorder %s164, %s165
      %p174 = scmp.eq.s32.totalorder %s23, 0
      %p175 = por %p173, %p174
      %p176 = scmp.ne.s32.totalorder %s164, %s165
      %p177 = scmp.eq.s32.totalorder %s24, 1
      %p178 = por %p176, %p177
      %p180 = scmp.ne.s32.totalorder %s165, %s179
      %p181 = scmp.eq.s32.totalorder %s24, 0
      %p182 = por %p180, %p181
      %s184 = sadd.s32 %s183, 1
      %p187 = scmp.eq.s32.totalorder %s18, 1
      %p188 = scmp.ne.s32.totalorder %s183, %s185
      %p189 = scmp.eq.s32.totalorder %s18, 0
      %p190 = por %p188, %p189
      %p191 = scmp.ne.s32.totalorder %s183, %s185
      %p192 = scmp.eq.s32.totalorder %s23, 1
      %p193 = por %p191, %p192
      %p194 = scmp.ne.s32.totalorder %s185, %s186
      %p195 = scmp.eq.s32.totalorder %s23, 0
      %p196 = por %p194, %p195
      %p197 = scmp.ne.s32.totalorder %s185, %s186
      %p198 = scmp.eq.s32.totalorder %s24, 1
      %p199 = por %p197, %p198
      %p201 = scmp.ne.s32.totalorder %s186, %s200
      %p202 = scmp.eq.s32.totalorder %s24, 0
      %p203 = por %p201, %p202
      %s205 = sadd.s32 %s204, 1
      %p208 = scmp.eq.s32.totalorder %s18, 1
      %p209 = scmp.ne.s32.totalorder %s204, %s206
      %p210 = scmp.eq.s32.totalorder %s18, 0
      %p211 = por %p209, %p210
      %p212 = scmp.ne.s32.totalorder %s204, %s206
      %p213 = scmp.eq.s32.totalorder %s23, 1
      %p214 = por %p212, %p213
      %p215 = scmp.ne.s32.totalorder %s206, %s207
      %p216 = scmp.eq.s32.totalorder %s23, 0
      %p217 = por %p215, %p216
      %p218 = scmp.ne.s32.totalorder %s206, %s207
      %p219 = scmp.eq.s32.totalorder %s24, 1
      %p220 = por %p218, %p219
      %p222 = scmp.ne.s32.totalorder %s207, %s221
      %p223 = scmp.eq.s32.totalorder %s24, 0
      %p224 = por %p222, %p223
      %s225 = ssub.s32 %s18, %s25
      %p226 = scmp.eq.s32.totalorder %s225, 0
      %s228 = sadd.s32 %s227, 1
      %s229 = scalar_select %p226, %s227, %s228
      %p232 = pneg %p226
      %p233 = scmp.eq.s32.totalorder %s18, 1
      %p234 = por %p232, %p233
      %p235 = scmp.ne.s32.totalorder %s227, %s230
      %p236 = scmp.eq.s32.totalorder %s18, 0
      %p237 = por %p235, %p236
      %p238 = scmp.ne.s32.totalorder %s227, %s230
      %p239 = scmp.eq.s32.totalorder %s23, 1
      %p240 = por %p238, %p239
      %p241 = scmp.ne.s32.totalorder %s230, %s231
      %p242 = scmp.eq.s32.totalorder %s23, 0
      %p243 = por %p241, %p242
      %p244 = scmp.ne.s32.totalorder %s230, %s231
      %p245 = scmp.eq.s32.totalorder %s24, 1
      %p246 = por %p244, %p245
      %p248 = scmp.ne.s32.totalorder %s231, %s247
      %p249 = scmp.eq.s32.totalorder %s24, 0
      %p250 = por %p248, %p249
      %p251 = scmp.le.s32.totalorder 1, %s18
      %p252 = scmp.lt.s32.totalorder %s18, 3
      %p253 = pnand %p251, %p252
      %p254 = pneg %p253
      // Predicated region
      $region9: #{tpu_custom_call.1} parent=5 // pred_check
        _
      $region10: #{tpu_custom_call.1} parent=5 // pred_check_branch
        %256 = sbr.rel (%p253) target = $region12
      $region11: #{tpu_custom_call.1} parent=5 // pred_region
        %s257 = ssub.s32 %s18, 1
        // Predicated region
        $region13: #{tpu_custom_call.1} parent=11 // pred_check
          %p258 = pneg %p91
        $region14: #{tpu_custom_call.1} parent=11 // pred_check_branch
          %260 = sbr.rel (%p258) target = $region16
        $region15: #{tpu_custom_call.1} parent=11 // pred_region
          _
        $region16: #{tpu_custom_call.1} parent=11 // pred_fallthru
          _
        // Predicated region
        $region17: #{tpu_custom_call.1} parent=11 // pred_check
          %p261 = pneg %p112
        $region18: #{tpu_custom_call.1} parent=11 // pred_check_branch
          %263 = sbr.rel (%p261) target = $region20
        $region19: #{tpu_custom_call.1} parent=11 // pred_region
          _
        $region20: #{tpu_custom_call.1} parent=11 // pred_fallthru
          _
        // Predicated region
        $region21: #{tpu_custom_call.1} parent=11 // pred_check
          %p264 = pneg %p133
        $region22: #{tpu_custom_call.1} parent=11 // pred_check_branch
          %266 = sbr.rel (%p264) target = $region24
        $region23: #{tpu_custom_call.1} parent=11 // pred_region
          _
        $region24: #{tpu_custom_call.1} parent=11 // pred_fallthru
          _
        // Predicated region
        $region25: #{tpu_custom_call.1} parent=11 // pred_check
          %p267 = pneg %p154
        $region26: #{tpu_custom_call.1} parent=11 // pred_check_branch
          %269 = sbr.rel (%p267) target = $region28
        $region27: #{tpu_custom_call.1} parent=11 // pred_region
          _
        $region28: #{tpu_custom_call.1} parent=11 // pred_fallthru
          _
        // Predicated region
        $region29: #{tpu_custom_call.1} parent=11 // pred_check
          %p270 = pneg %p175
        $region30: #{tpu_custom_call.1} parent=11 // pred_check_branch
          %272 = sbr.rel (%p270) target = $region32
        $region31: #{tpu_custom_call.1} parent=11 // pred_region
          _
        $region32: #{tpu_custom_call.1} parent=11 // pred_fallthru
          _
        // Predicated region
        $region33: #{tpu_custom_call.1} parent=11 // pred_check
          %p273 = pneg %p196
        $region34: #{tpu_custom_call.1} parent=11 // pred_check_branch
          %275 = sbr.rel (%p273) target = $region36
        $region35: #{tpu_custom_call.1} parent=11 // pred_region
          _
        $region36: #{tpu_custom_call.1} parent=11 // pred_fallthru
          _
        // Predicated region
        $region37: #{tpu_custom_call.1} parent=11 // pred_check
          %p276 = pneg %p217
        $region38: #{tpu_custom_call.1} parent=11 // pred_check_branch
          %278 = sbr.rel (%p276) target = $region40
        $region39: #{tpu_custom_call.1} parent=11 // pred_region
          _
        $region40: #{tpu_custom_call.1} parent=11 // pred_fallthru
          _
      $region12: #{tpu_custom_call.1} parent=5 // pred_fallthru
        _
      %p279 = scmp.lt.s32.totalorder %s18, 2
      // Predicated region
      $region41: #{tpu_custom_call.1} parent=5 // pred_check
        %p280 = pneg %p279
      $region42: #{tpu_custom_call.1} parent=5 // pred_check_branch
        %282 = sbr.rel (%p280) target = $region44
      $region43: #{tpu_custom_call.1} parent=5 // pred_region
        // Predicated region
        $region45: #{tpu_custom_call.1} parent=43 // pred_check
          %p283 = pneg %p38
        $region46: #{tpu_custom_call.1} parent=43 // pred_check_branch
          %285 = sbr.rel (%p283) target = $region48
        $region47: #{tpu_custom_call.1} parent=43 // pred_region
          %s286 = smul.u32 2, %s18
          %p287 = scmp.lt.s32.totalorder %s286, 3
          %s288 = scalar_select %p287, %s286, 3
          %s289 = smul.addr %s288, 8
          %s290 = scalar_lea.vmem %s0, %s289
          %s291 = smul.u32 2, %s18
        $region48: #{tpu_custom_call.1} parent=43 // pred_fallthru
          _
        // Predicated region
        $region49: #{tpu_custom_call.1} parent=43 // pred_check
          %p292 = pneg %p64
        $region50: #{tpu_custom_call.1} parent=43 // pred_check_branch
          %294 = sbr.rel (%p292) target = $region52
        $region51: #{tpu_custom_call.1} parent=43 // pred_region
          %s295 = smul.u32 2, %s18
          %p296 = scmp.lt.s32.totalorder %s295, 3
          %s297 = scalar_select %p296, %s295, 3
          %s298 = smul.addr %s297, 4
          %s299 = scalar_lea.vmem %s1, %s298
          %s300 = smul.u32 2, %s18
        $region52: #{tpu_custom_call.1} parent=43 // pred_fallthru
          _
      $region44: #{tpu_custom_call.1} parent=5 // pred_fallthru
        _
      %p301 = scmp.le.s32.totalorder 1, %s18
      %p302 = scmp.lt.s32.totalorder %s18, 3
      %p303 = pnand %p301, %p302
      %p304 = pneg %p303
      // Predicated region
      $region53: #{tpu_custom_call.1} parent=5 // pred_check
        _
      $region54: #{tpu_custom_call.1} parent=5 // pred_check_branch
        %306 = sbr.rel (%p303) target = $region56
      $region55: #{tpu_custom_call.1} parent=5 // pred_region
        %s307 = ssub.s32 %s18, 1
        %s308 = smul.u32 2, %s23
        %p309 = scmp.lt.s32.totalorder %s308, 3
        %s310 = scalar_select %p309, %s308, 3
        %s311 = smul.addr %s310, 8
        %s312 = scalar_lea.vmem %s0, %s311
        %p313 = pneg %p44
        %p314 = pneg %p41
        %s315 = smul.u32 2, %s23
        %p316 = scmp.lt.s32.totalorder %s315, 3
        %s317 = scalar_select %p316, %s315, 3
        %s318 = smul.addr %s317, 4
        %s319 = scalar_lea.vmem %s1, %s318
        %p320 = pneg %p70
        %p321 = pneg %p67
        %p322 = pneg %p91
        %p323 = pneg %p88
        %p324 = pneg %p112
        %p325 = pneg %p109
        %p326 = pneg %p133
        %p327 = pneg %p130
        %p328 = pneg %p154
        %p329 = pneg %p151
        %p330 = pneg %p175
        %p331 = pneg %p172
        %p332 = pneg %p196
        %p333 = pneg %p193
        %p334 = pneg %p217
        %p335 = pneg %p214
        %p336 = pneg %p243
        %p337 = pneg %p240
        %s338 = sand.u32 %s230, 1
        %s339 = scalar_lea.sflag [#allocation3], %s338
        %s340 = sand.u32 %s230, 1
        %s341 = smul.addr %s340, 16
        %s342 = scalar_lea.vmem [#allocation2], %s341
        %s343 = smul.u32 2, %s23
        %p344 = scmp.lt.s32.totalorder %s343, 3
        %s345 = scalar_select %p344, %s343, 3
        %s346 = smul.addr %s345, 8
        %s347 = scalar_lea.vmem %s0, %s346
        %s348 = smul.u32 2, %s23
        %s349 = smul.u32 2, %s23
        %p350 = scmp.lt.s32.totalorder %s349, 3
        %s351 = scalar_select %p350, %s349, 3
        %s352 = smul.addr %s351, 4
        %s353 = scalar_lea.vmem %s1, %s352
        %s354 = smul.u32 2, %s23
        %s355 = smul.u32 2, %s23
        %v357 = vld [vmem:[%s4] sm:$0x1]
        %v358 = vld [vmem:[%s2] sm:$0x1]
        %v359 = vld [vmem:[%s347] sm:$0xff]
        %v360 = vld [vmem:[%s347 + $0x8] sm:$0xff]
        %v362 = vlaneseq
        %v363 = vshrl.u32 %v362, 7
        %v364 = vsub.s32 0, %v363
        %v365 = vrot.slane %v358, %v364
        %368 = vset.pattern.permute.xlu0 0
        %369 = vperm.xlu0 %368, %v359
        %v370 = vpop.permute.xlu0 %369
        %373 = vset.pattern.permute.xlu0 0
        %374 = vperm.xlu0 %373, %v360
        %v375 = vpop.permute.xlu0 %374
        %v377 = vmul.f32 %v365, %v370
        %v378 = vmul.f32 %v365, %v375
        %v379 = vld [vmem:[%s3] sm:$0x1]
        %v381 = vlaneseq
        %v382 = vshrl.u32 %v381, 7
        %v383 = vsub.s32 0, %v382
        %v384 = vrot.slane %v379, %v383
        %v386 = vadd.f32 %v377, %v384
        %v387 = vadd.f32 %v378, %v384
        %v388 = vand.u32 2147483647, %v386
        %vm389 = vcmp.le.f32.partialorder %v388, 0.7853982
        %vm390 = vcmp.lt.s32.totalorder %v386, 0
        %v391 = vand.u32 %v386, 2139095040
        %v392 = vshrl.u32 %v391, 23
        %v393 = vsub.s32 %v392, 127
        %v394 = vand.u32 2147483647, %v386
        %v395 = vand.u32 %v394, 8388607
        %v396 = vor.u32 %v395, 8388608
        %v397 = vsub.s32 0, %v396
        %v398 = vadd.s32 %v393, 1
        %vm399 = vcmp.gt.s32.totalorder %v398, 0
        %v400 = vsel %vm399, %v398, 0
        %v401 = vshrl.u32 %v400, 5
        %v402 = vand.u32 %v400, 31
        %v403 = vsub.s32 32, %v402
        %v404 = vshrl.u32 683565275, %v403
        %v405 = vshll.u32 683565275, %v402
        %v406 = vshrl.u32 2475754826, %v403
        %v407 = vor.u32 %v405, %v406
        %v408 = vshll.u32 2475754826, %v402
        %v409 = vshrl.u32 2131351028, %v403
        %v410 = vor.u32 %v408, %v409
        %v411 = vshll.u32 2131351028, %v402
        %v412 = vshrl.u32 2102212464, %v403
        %v413 = vor.u32 %v411, %v412
        %v414 = vshll.u32 2102212464, %v402
        %v415 = vshrl.u32 920167782, %v403
        %v416 = vor.u32 %v414, %v415
        %v417 = vshll.u32 920167782, %v402
        %v418 = vshrl.u32 1326507024, %v403
        %v419 = vor.u32 %v417, %v418
        %vm420 = vcmp.lt.s32.totalorder %v401, 1
        %vm421 = vcmp.lt.s32.totalorder %v401, 2
        %vm422 = vcmp.lt.s32.totalorder %v401, 3
        %vm423 = vcmp.lt.s32.totalorder %v401, 4
        %v424 = vsel %vm420, %v404, %v407
        %v425 = vsel %vm423, %v413, 2102212464
        %v426 = vsel %vm422, %v410, %v425
        %v427 = vsel %vm421, %v424, %v426
        %v428 = vsel %vm420, %v407, %v410
        %v429 = vsel %vm423, %v416, 920167782
        %v430 = vsel %vm422, %v413, %v429
        %v431 = vsel %vm421, %v428, %v430
        %v432 = vsel %vm420, %v410, %v413
        %v433 = vsel %vm423, %v419, 1326507024
        %v434 = vsel %vm422, %v416, %v433
        %v435 = vsel %vm421, %v432, %v434
        %v436 = vshll.u32 %v396, 8
        %v437 = vmul.u32.u64.compose %v436, %v435
        %v438 = vextract.low.u32 %v437
        %v439 = vextract.high.u32 %v437
        %v440 = vmul.u32.u64.compose %v436, %v431
        %v441 = vextract.low.u32 %v440
        %v442 = vextract.high.u32 %v440
        %v443 = vmul.u32 %v436, %v427
        %v444 = vadd.s32 %v439, %v441
        %vm445 = vc.u32 %v439, %v441
        %v446 = vadd.s32 %v442, 1
        %v447 = vsel %vm445, %v446, %v442
        %v448 = vadd.s32 %v443, %v447
        %v449 = vadd.s32 %v448, 536870912
        %v450 = vshrl.u32 %v449, 30
        %v451 = vshll.u32 %v450, 30
        %v452 = vsub.s32 %v448, %v451
        %vm453 = vcmp.lt.s32.totalorder %v452, 0
        %v454 = vsub.s32 0, %v452
        %v455 = vsel %vm453, %v454, %v452
        %v456 = vclz %v455
        %v457 = vsub.s32 %v456, 2
        %vm458 = vcmp.gt.s32.totalorder 0, %v457
        %v459 = vsel %vm458, 0, %v457
        %v460 = vsub.s32 32, %v459
        %v461 = vshll.u32 %v452, %v459
        %v462 = vshrl.u32 %v444, %v460
        %v463 = vor.u32 %v461, %v462
        %v464 = vsub.s32 4294967266, %v459
        %v465 = vadd.s32 %v464, 127
        %v466 = vshll.u32 %v465, 23
        %v467 = vor.u32 4788187, %v466
        %v468 = vand.u32 2147483647, %v467
        %v470 = vcvt.s32.f32 %v463
        %v471 = vmul.f32 %v470, %v468
        %v472 = vxor.u32 %v471, 2147483648
        %v473 = vsel %vm390, %v472, %v471
        %v474 = vsub.s32 4, %v450
        %v475 = vsel %vm390, %v474, %v450
        %v476 = vsel %vm389, %v386, %v473
        %v477 = vsel %vm389, 0, %v475
        %v478 = vcosq.f32.pop %v476
        %v479 = vsinq.f32.pop %v476
        %vm480 = vweird.f32 %v386
        %v481 = vadd.s32 %v477, 3
        %v482 = vand.u32 %v481, 3
        %vm483 = vcmp.lt.s32.totalorder %v482, 2
        %vm484 = vcmp.eq.s32.totalorder %v482, 0
        %v485 = vxor.u32 %v479, 2147483648
        %v486 = vsel %vm484, %v478, %v485
        %vm487 = vcmp.eq.s32.totalorder %v482, 2
        %v488 = vxor.u32 %v478, 2147483648
        %v489 = vsel %vm487, %v488, %v479
        %v490 = vsel %vm483, %v486, %v489
        %v491 = vsel %vm480, nan, %v490
        %v492 = vand.u32 2147483647, %v387
        %vm493 = vcmp.le.f32.partialorder %v492, 0.7853982
        %vm494 = vcmp.lt.s32.totalorder %v387, 0
        %v495 = vand.u32 %v387, 2139095040
        %v496 = vshrl.u32 %v495, 23
        %v497 = vsub.s32 %v496, 127
        %v498 = vand.u32 2147483647, %v387
        %v499 = vand.u32 %v498, 8388607
        %v500 = vor.u32 %v499, 8388608
        %v501 = vsub.s32 0, %v500
        %v502 = vadd.s32 %v497, 1
        %vm503 = vcmp.gt.s32.totalorder %v502, 0
        %v504 = vsel %vm503, %v502, 0
        %v505 = vshrl.u32 %v504, 5
        %v506 = vand.u32 %v504, 31
        %v507 = vsub.s32 32, %v506
        %v508 = vshrl.u32 683565275, %v507
        %v509 = vshll.u32 683565275, %v506
        %v510 = vshrl.u32 2475754826, %v507
        %v511 = vor.u32 %v509, %v510
        %v512 = vshll.u32 2475754826, %v506
        %v513 = vshrl.u32 2131351028, %v507
        %v514 = vor.u32 %v512, %v513
        %v515 = vshll.u32 2131351028, %v506
        %v516 = vshrl.u32 2102212464, %v507
        %v517 = vor.u32 %v515, %v516
        %v518 = vshll.u32 2102212464, %v506
        %v519 = vshrl.u32 920167782, %v507
        %v520 = vor.u32 %v518, %v519
        %v521 = vshll.u32 920167782, %v506
        %v522 = vshrl.u32 1326507024, %v507
        %v523 = vor.u32 %v521, %v522
        %vm524 = vcmp.lt.s32.totalorder %v505, 1
        %vm525 = vcmp.lt.s32.totalorder %v505, 2
        %vm526 = vcmp.lt.s32.totalorder %v505, 3
        %vm527 = vcmp.lt.s32.totalorder %v505, 4
        %v528 = vsel %vm524, %v508, %v511
        %v529 = vsel %vm527, %v517, 2102212464
        %v530 = vsel %vm526, %v514, %v529
        %v531 = vsel %vm525, %v528, %v530
        %v532 = vsel %vm524, %v511, %v514
        %v533 = vsel %vm527, %v520, 920167782
        %v534 = vsel %vm526, %v517, %v533
        %v535 = vsel %vm525, %v532, %v534
        %v536 = vsel %vm524, %v514, %v517
        %v537 = vsel %vm527, %v523, 1326507024
        %v538 = vsel %vm526, %v520, %v537
        %v539 = vsel %vm525, %v536, %v538
        %v540 = vshll.u32 %v500, 8
        %v541 = vmul.u32.u64.compose %v540, %v539
        %v542 = vextract.low.u32 %v541
        %v543 = vextract.high.u32 %v541
        %v544 = vmul.u32.u64.compose %v540, %v535
        %v545 = vextract.low.u32 %v544
        %v546 = vextract.high.u32 %v544
        %v547 = vmul.u32 %v540, %v531
        %v548 = vadd.s32 %v543, %v545
        %vm549 = vc.u32 %v543, %v545
        %v550 = vadd.s32 %v546, 1
        %v551 = vsel %vm549, %v550, %v546
        %v552 = vadd.s32 %v547, %v551
        %v553 = vadd.s32 %v552, 536870912
        %v554 = vshrl.u32 %v553, 30
        %v555 = vshll.u32 %v554, 30
        %v556 = vsub.s32 %v552, %v555
        %vm557 = vcmp.lt.s32.totalorder %v556, 0
        %v558 = vsub.s32 0, %v556
        %v559 = vsel %vm557, %v558, %v556
        %v560 = vclz %v559
        %v561 = vsub.s32 %v560, 2
        %vm562 = vcmp.gt.s32.totalorder 0, %v561
        %v563 = vsel %vm562, 0, %v561
        %v564 = vsub.s32 32, %v563
        %v565 = vshll.u32 %v556, %v563
        %v566 = vshrl.u32 %v548, %v564
        %v567 = vor.u32 %v565, %v566
        %v568 = vsub.s32 4294967266, %v563
        %v569 = vadd.s32 %v568, 127
        %v570 = vshll.u32 %v569, 23
        %v571 = vor.u32 4788187, %v570
        %v572 = vand.u32 2147483647, %v571
        %v574 = vcvt.s32.f32 %v567
        %v575 = vmul.f32 %v574, %v572
        %v576 = vxor.u32 %v575, 2147483648
        %v577 = vsel %vm494, %v576, %v575
        %v578 = vsub.s32 4, %v554
        %v579 = vsel %vm494, %v578, %v554
        %v580 = vsel %vm493, %v387, %v577
        %v581 = vsel %vm493, 0, %v579
        %v582 = vcosq.f32.pop %v580
        %v583 = vsinq.f32.pop %v580
        %vm584 = vweird.f32 %v387
        %v585 = vadd.s32 %v581, 3
        %v586 = vand.u32 %v585, 3
        %vm587 = vcmp.lt.s32.totalorder %v586, 2
        %vm588 = vcmp.eq.s32.totalorder %v586, 0
        %v589 = vxor.u32 %v583, 2147483648
        %v590 = vsel %vm588, %v582, %v589
        %vm591 = vcmp.eq.s32.totalorder %v586, 2
        %v592 = vxor.u32 %v582, 2147483648
        %v593 = vsel %vm591, %v592, %v583
        %v594 = vsel %vm587, %v590, %v593
        %v595 = vsel %vm584, nan, %v594
        %v597 = vlaneseq
        %v598 = vshrl.u32 %v597, 7
        %v599 = vsub.s32 0, %v598
        %v600 = vrot.slane %v357, %v599
        %v602 = vmul.f32 %v600, %v491
        %v603 = vmul.f32 %v600, %v595
        %v604 = vpack.c.bf16 %v603, %v602
        %v605 = vld [vmem:[%s5] sm:$0xf]
        %vm606 = vcmask 64512
        %v608 = vsel %vm606, %v604, 0
        %vm610 = vcmask 1043456
        %v612 = vsel %vm610, %v605, 0
        %614 = vmatprep.subr.bf16.mxu0 0
        %615 = vmatpush1.bf16.msra.mxu0 %v612
        %616 = vmatprep.subr.bf16.mxu0 0
        %617 = vmatpush1.bf16.msra.mxu0 0
        %618 = vmatprep.subr.bf16.mxu0 0
        %619 = vmatpush1.bf16.msra.mxu0 0
        %620 = vmatprep.subr.bf16.mxu0 0
        %621 = vmatpush1.bf16.msra.mxu0 0
        %622 = vmatprep.subr.bf16.mxu0 0
        %623 = vmatpush1.bf16.msra.mxu0 0
        %624 = vmatprep.subr.bf16.mxu0 0
        %625 = vmatpush1.bf16.msra.mxu0 0
        %626 = vmatprep.subr.bf16.mxu0 0
        %627 = vmatpush1.bf16.msra.mxu0 0
        %628 = vmatprep.subr.bf16.mxu0 0
        %629 = vmatpush1.bf16.msra.mxu0 0
        %630 = vmatprep.subr.bf16.mxu0 0
        %631 = vmatpush1.bf16.msra.mxu0 0
        %632 = vmatprep.subr.bf16.mxu0 0
        %633 = vmatpush1.bf16.msra.mxu0 0
        %634 = vmatprep.subr.bf16.mxu0 0
        %635 = vmatpush1.bf16.msra.mxu0 0
        %636 = vmatprep.subr.bf16.mxu0 0
        %637 = vmatpush1.bf16.msra.mxu0 0
        %638 = vmatprep.subr.bf16.mxu0 0
        %639 = vmatpush1.bf16.msra.mxu0 0
        %640 = vmatprep.subr.bf16.mxu0 0
        %641 = vmatpush1.bf16.msra.mxu0 0
        %642 = vmatprep.subr.bf16.mxu0 0
        %643 = vmatpush1.bf16.msra.mxu0 0
        %644 = vmatprep.subr.bf16.mxu0 0
        %645 = vmatpush1.bf16.msra.mxu0 0
        %646 = vmatprep.mubr.bf16.mxu0 0
        %647 = vmatmul.mubr.bf16.gmra.mrb[0].mxu0 %v608
        %v648 = vpop.f32.mrb[0].mxu0
        %v649 = vadd.f32 0.0, %v648
        %v650 = vpop.f32.mrb[0].mxu0
        %v651 = vpop.f32.mrb[0].mxu0
        %v652 = vadd.f32 0.0, %v651
        %v653 = vpop.f32.mrb[0].mxu0
        %654 = vdwg.mxu0
        %v655 = vld [vmem:[%s6] sm:$0xf]
        %v657 = vsel %vm610, %v655, 0
        %659 = vmatprep.subr.bf16.mxu0 0
        %660 = vmatpush1.bf16.msra.mxu0 %v657
        %661 = vmatprep.subr.bf16.mxu0 0
        %662 = vmatpush1.bf16.msra.mxu0 0
        %663 = vmatprep.subr.bf16.mxu0 0
        %664 = vmatpush1.bf16.msra.mxu0 0
        %665 = vmatprep.subr.bf16.mxu0 0
        %666 = vmatpush1.bf16.msra.mxu0 0
        %667 = vmatprep.subr.bf16.mxu0 0
        %668 = vmatpush1.bf16.msra.mxu0 0
        %669 = vmatprep.subr.bf16.mxu0 0
        %670 = vmatpush1.bf16.msra.mxu0 0
        %671 = vmatprep.subr.bf16.mxu0 0
        %672 = vmatpush1.bf16.msra.mxu0 0
        %673 = vmatprep.subr.bf16.mxu0 0
        %674 = vmatpush1.bf16.msra.mxu0 0
        %675 = vmatprep.subr.bf16.mxu0 0
        %676 = vmatpush1.bf16.msra.mxu0 0
        %677 = vmatprep.subr.bf16.mxu0 0
        %678 = vmatpush1.bf16.msra.mxu0 0
        %679 = vmatprep.subr.bf16.mxu0 0
        %680 = vmatpush1.bf16.msra.mxu0 0
        %681 = vmatprep.subr.bf16.mxu0 0
        %682 = vmatpush1.bf16.msra.mxu0 0
        %683 = vmatprep.subr.bf16.mxu0 0
        %684 = vmatpush1.bf16.msra.mxu0 0
        %685 = vmatprep.subr.bf16.mxu0 0
        %686 = vmatpush1.bf16.msra.mxu0 0
        %687 = vmatprep.subr.bf16.mxu0 0
        %688 = vmatpush1.bf16.msra.mxu0 0
        %689 = vmatprep.subr.bf16.mxu0 0
        %690 = vmatpush1.bf16.msra.mxu0 0
        %691 = vmatprep.mubr.bf16.mxu0 0
        %692 = vmatmul.mubr.bf16.gmra.mrb[0].mxu0 %v608
        %v693 = vpop.f32.mrb[0].mxu0
        %v694 = vadd.f32 0.0, %v693
        %v695 = vpop.f32.mrb[0].mxu0
        %v696 = vpop.f32.mrb[0].mxu0
        %v697 = vadd.f32 0.0, %v696
        %v698 = vpop.f32.mrb[0].mxu0
        %699 = vdwg.mxu0
        %v700 = vtanh.pop %v649
        %v701 = vtanh.pop %v652
        %v702 = vld [vmem:[%s353] sm:$0xf]
        %v703 = vld [vmem:[%s353 + $0x4] sm:$0xf]
        %v704 = vunpack.c.l.bf16 %v702
        %v705 = vunpack.c.l.bf16 %v703
        %v706 = vmul.f32 %v700, %v704
        %v707 = vmul.f32 %v701, %v705
        %v708 = vadd.f32 %v706, %v694
        %v709 = vadd.f32 %v707, %v697
        %v710 = vlaneseq
        %v711 = vshrl.u32 %v710, 7
        %v712 = vadd.s32 %v711, 8
        %vm713 = vcmp.lt.s32.totalorder %v711, 0
        %v714 = vsub.s32 0, %v711
        %v715 = vsel %vm713, %v714, %v711
        %v716 = vshrl.u32 %v715, 3
        %v717 = vand.u32 %v715, 7
        %v718 = vsub.s32 0, %v717
        %v719 = vsel %vm713, %v718, %v717
        %vm720 = vcmp.lt.s32.totalorder %v712, 0
        %v721 = vsub.s32 0, %v712
        %v722 = vsel %vm720, %v721, %v712
        %v723 = vshrl.u32 %v722, 3
        %v724 = vand.u32 %v722, 7
        %v725 = vsub.s32 0, %v724
        %v726 = vsel %vm720, %v725, %v724
        %vm727 = vcmp.ne.s32.totalorder %v719, 0
        %vm728 = vcmp.ne.s32.totalorder %v726, 0
        %vm729 = vcmp.lt.s32.totalorder %v719, 0
        %vm730 = vcmp.lt.s32.totalorder %v726, 0
        %vm731 = vmand %vm729, %vm727
        %vm732 = vmand %vm730, %vm728
        %v733 = vadd.s32 %v719, 8
        %v734 = vadd.s32 %v726, 8
        %v735 = vsel %vm731, %v733, %v719
        %v736 = vsel %vm732, %v734, %v726
        %v738 = vrot.slane %v709, 6
        %vm741 = vcmask 1041408
        %v742 = vrot.slane %v708, 6
        %v743 = vsel %vm741, %v742, %v738
        %v746 = vsel %vm741, %v738, %v742
        %vm747 = vcmp.ge.s32.totalorder %v735, 2
        %vm748 = vcmp.ge.s32.totalorder %v736, 2
        %v749 = vsel %vm747, 1, 0
        %v750 = vsel %vm748, 1, 0
        %vm751 = vcmp.eq.s32.totalorder %v749, 1
        %vm752 = vcmp.eq.s32.totalorder %v750, 1
        %v753 = vsel %vm751, %v746, 0.0
        %v754 = vsel %vm752, %v743, 0.0
        %v755 = vrot.slane %v709, 7
        %vm757 = vcmask 1040384
        %v758 = vrot.slane %v708, 7
        %v759 = vsel %vm757, %v758, %v755
        %v762 = vsel %vm757, %v755, %v758
        %vm763 = vcmp.ge.s32.totalorder %v735, 1
        %vm764 = vcmp.ge.s32.totalorder %v736, 1
        %v765 = vsel %vm763, 1, 0
        %v766 = vsel %vm764, 1, 0
        %vm767 = vcmp.eq.s32.totalorder %v765, 1
        %vm768 = vcmp.eq.s32.totalorder %v766, 1
        %v769 = vsel %vm767, %v762, 0.0
        %v770 = vsel %vm768, %v759, 0.0
        %773 = vrot.lane.b32.xlu0 %v769, 32
        %v774 = vpop.permute.xlu0 %773
        %775 = vrot.lane.b32.xlu0 %v770, 32
        %v776 = vpop.permute.xlu0 %775
        %779 = vrot.lane.b32.xlu0 %v708, 64
        %v780 = vpop.permute.xlu0 %779
        %781 = vrot.lane.b32.xlu0 %v709, 64
        %v782 = vpop.permute.xlu0 %781
        %vm785 = vcmask 261120
        %v786 = vsel %vm785, %v753, %v774
        %v787 = vsel %vm785, %v754, %v776
        %vm788 = vcmask 523264
        %v789 = vsel %vm788, %v786, %v780
        %v790 = vsel %vm788, %v787, %v782
        %v791 = vpack.c.bf16 %v790, %v789
        %v792 = vld [vmem:[%s7] sm:$0xf]
        %v793 = vld [vmem:[%s7 + $0x4] sm:$0xf]
        %v794 = vld [vmem:[%s7 + $0x8] sm:$0xf]
        %v795 = vld [vmem:[%s7 + $0xc] sm:$0xf]
        %v796 = vld [vmem:[%s7 + $0x10] sm:$0xf]
        %v797 = vld [vmem:[%s7 + $0x14] sm:$0xf]
        %v798 = vld [vmem:[%s7 + $0x18] sm:$0xf]
        %v799 = vld [vmem:[%s7 + $0x1c] sm:$0xf]
        %v800 = vld [vmem:[%s7 + $0x20] sm:$0xf]
        %v801 = vld [vmem:[%s7 + $0x24] sm:$0xf]
        %v802 = vld [vmem:[%s7 + $0x28] sm:$0xf]
        %v803 = vld [vmem:[%s7 + $0x2c] sm:$0xf]
        %v804 = vld [vmem:[%s8] sm:$0x1]
        %v806 = vlaneseq
        %v807 = vshrl.u32 %v806, 7
        %v808 = vsub.s32 0, %v807
        %v809 = vrot.slane %v804, %v808
        %v823 = vunpack.c.l.b16 %v792
        %v824 = vunpack.c.l.b16 %v793
        %v825 = vunpack.c.l.b16 %v794
        %v826 = vunpack.c.l.b16 %v795
        %v827 = vunpack.c.l.b16 %v796
        %v828 = vunpack.c.l.b16 %v797
        %v829 = vunpack.c.l.b16 %v798
        %v830 = vunpack.c.l.b16 %v799
        %v831 = vunpack.c.l.b16 %v800
        %v832 = vunpack.c.l.b16 %v801
        %v833 = vunpack.c.l.b16 %v802
        %v834 = vunpack.c.l.b16 %v803
        %v835 = vpack.c.b16 %v824, %v823
        %v836 = vpack.c.b16 %v826, %v825
        %v837 = vpack.c.b16 %v828, %v827
        %v838 = vpack.c.b16 %v830, %v829
        %v839 = vpack.c.b16 %v832, %v831
        %v840 = vpack.c.b16 %v834, %v833
        %vm847 = vcmask 785408
        %v849 = vsel %vm847, %v791, 0
        %851 = vmatprep.subr.bf16.mxu0 0
        %852 = vmatpush1.bf16.msra.mxu0 %v835
        %853 = vmatprep.subr.bf16.mxu0 0
        %854 = vmatpush1.bf16.msra.mxu0 %v836
        %855 = vmatprep.subr.bf16.mxu0 0
        %856 = vmatpush1.bf16.msra.mxu0 %v837
        %857 = vmatprep.subr.bf16.mxu0 0
        %858 = vmatpush1.bf16.msra.mxu0 %v838
        %859 = vmatprep.subr.bf16.mxu0 0
        %860 = vmatpush1.bf16.msra.mxu0 %v839
        %861 = vmatprep.subr.bf16.mxu0 0
        %862 = vmatpush1.bf16.msra.mxu0 %v840
        %863 = vmatprep.subr.bf16.mxu0 0
        %864 = vmatpush1.bf16.msra.mxu0 0
        %865 = vmatprep.subr.bf16.mxu0 0
        %866 = vmatpush1.bf16.msra.mxu0 0
        %867 = vmatprep.subr.bf16.mxu0 0
        %868 = vmatpush1.bf16.msra.mxu0 0
        %869 = vmatprep.subr.bf16.mxu0 0
        %870 = vmatpush1.bf16.msra.mxu0 0
        %871 = vmatprep.subr.bf16.mxu0 0
        %872 = vmatpush1.bf16.msra.mxu0 0
        %873 = vmatprep.subr.bf16.mxu0 0
        %874 = vmatpush1.bf16.msra.mxu0 0
        %875 = vmatprep.subr.bf16.mxu0 0
        %876 = vmatpush1.bf16.msra.mxu0 0
        %877 = vmatprep.subr.bf16.mxu0 0
        %878 = vmatpush1.bf16.msra.mxu0 0
        %879 = vmatprep.subr.bf16.mxu0 0
        %880 = vmatpush1.bf16.msra.mxu0 0
        %881 = vmatprep.subr.bf16.mxu0 0
        %882 = vmatpush1.bf16.msra.mxu0 0
        %883 = vmatprep.mubr.bf16.mxu0 0
        %884 = vmatmul.mubr.bf16.gmra.mrb[0].mxu0 %v849
        %v885 = vpop.f32.mrb[0].mxu0
        %v886 = vadd.f32 %v809, %v885
        %v887 = vpop.f32.mrb[0].mxu0
        %v888 = vpop.f32.mrb[0].mxu0
        %v889 = vadd.f32 %v809, %v888
        %v890 = vpop.f32.mrb[0].mxu0
        %891 = vdwg.mxu0
        %v892 = vmax.f32 %v886, 0.0
        %v893 = vmax.f32 %v889, 0.0
        %894 = vst.msk [vmem:[%s342] sm:$0xff] %vm785, %v892
        %895 = vst.msk [vmem:[%s342 + $0x8] sm:$0xff] %vm785, %v893
        %s896 = sand.u32 %s230, 1
        %s897 = scalar_lea.sflag [#allocation3], %s896
        %s898 = sand.u32 %s230, 1
        %s899 = smul.addr %s898, 16
        %s900 = scalar_lea.vmem [#allocation2], %s899
        // Predicated region
        $region57: #{tpu_custom_call.1} parent=55 // pred_check
          %p901 = pneg %p240
        $region58: #{tpu_custom_call.1} parent=55 // pred_check_branch
          %903 = sbr.rel (%p901) target = $region60
        $region59: #{tpu_custom_call.1} parent=55 // pred_region
          %s904 = smul.u32 2, %s23
          %s906 = ssub.s32 256, 256
          %907 = vsyncadd %s897, %s906
          %s908 = smul.addr %s904, 128
          %s909 = scalar_lea.hbm %s9, %s908
          %s910 = sshll.u32 %s900, 4
          %s911 = int_to_ptr.vmem [resolvable:$true] %s910
          %916 = dma.vmem_to_hbm [thread:$0]  %s911, 256, %s909, %s897, 128, 128, 8
        $region60: #{tpu_custom_call.1} parent=55 // pred_fallthru
          _
      $region56: #{tpu_custom_call.1} parent=5 // pred_fallthru
        _
      %p917 = scmp.le.s32.totalorder 2, %s18
      // Predicated region
      $region61: #{tpu_custom_call.1} parent=5 // pred_check
        %p918 = pneg %p917
      $region62: #{tpu_custom_call.1} parent=5 // pred_check_branch
        %920 = sbr.rel (%p918) target = $region64
      $region63: #{tpu_custom_call.1} parent=5 // pred_region
        %s921 = ssub.s32 %s18, 2
        // Predicated region
        $region65: #{tpu_custom_call.1} parent=63 // pred_check
          %p922 = pneg %p246
        $region66: #{tpu_custom_call.1} parent=63 // pred_check_branch
          %924 = sbr.rel (%p922) target = $region68
        $region67: #{tpu_custom_call.1} parent=63 // pred_region
          %s925 = sand.u32 %s231, 1
          %s926 = scalar_lea.sflag [#allocation3], %s925
          %s927 = sand.u32 %s231, 1
          %s928 = smul.addr %s927, 16
          %s929 = scalar_lea.vmem [#allocation2], %s928
          %930 = dma.done %s926, 256
        $region68: #{tpu_custom_call.1} parent=63 // pred_fallthru
          _
      $region64: #{tpu_custom_call.1} parent=5 // pred_fallthru
        _
    $region6: #{tpu_custom_call.1} parent=1 // loop_footer
      %s22 = sadd.s32 1, %s18
    $region7: #{tpu_custom_call.1} parent=1 // loop_footer_branch
      %17 = sbr.rel target = $region3
    $region8: #{tpu_custom_call.1} parent=1 // loop_exit
      _
    %931 = vsyncpa [#allocation3], 1
    %s932 = scalar_lea.sflag [#allocation3], 1
    %933 = vsyncpa %s932, 1

// kernel: tpu_custom_call.1
$region0: #{tpu_custom_call.1}
  #allocation0 [shape = 'u32[]', space=smem, size = 0x4, offset = 0x4, fixed_abs, tag = 'smem constant byte address 0x4 - core index']
  #allocation1 [shape = 'u32[144,128]{1,0:T(1,128)}', space=vmem, size = 0x12000, scoped, tag = 'internal scratch']
  %s0 = inlined_call_operand.vmem [shape: f32[32,1], index: 0, kind: input, shape index: {}]
  %s1 = inlined_call_operand.vmem [shape: bf16[32,32], index: 1, kind: input, shape index: {}]
  %s2 = inlined_call_operand.vmem [shape: f32[1,8], index: 2, kind: input, shape index: {}]
  %s3 = inlined_call_operand.vmem [shape: f32[1,8], index: 3, kind: input, shape index: {}]
  %s4 = inlined_call_operand.vmem [shape: f32[1,8], index: 4, kind: input, shape index: {}]
  %s5 = inlined_call_operand.vmem [shape: bf16[8,32], index: 5, kind: input, shape index: {}]
  %s6 = inlined_call_operand.vmem [shape: bf16[8,32], index: 6, kind: input, shape index: {}]
  %s7 = inlined_call_operand.vmem [shape: bf16[96,32], index: 7, kind: input, shape index: {}]
  %s8 = inlined_call_operand.vmem [shape: f32[1,32], index: 8, kind: input, shape index: {}]
  %s9 = inlined_call_operand.hbm [shape: f32[32,32], index: 9, kind: output, shape index: {}]
  %s10 = sld [smem:[#allocation0]]
  $region69: #{tpu_custom_call.1} parent=0
    _
  %s12 = ssub.s32 1, %s10
  %s13 = scalar_select 0, %s12, %s10
  $region1: #{tpu_custom_call.1} parent=0
    #allocation2 [shape = 'u8[16384]{0}', space=vmem, size = 0x4000, scoped, tag = 'output window, operand 0']
    #allocation3 [shape = 's32[2]{0}', space=sflag, size = 0x8, scoped, tag = 'scoped memory for tpu_custom_call.1']
    %14 = vsyncpa [#allocation3], 0
    %s15 = scalar_lea.sflag [#allocation3], 1
    %16 = vsyncpa %s15, 0
    loop: start=0, step=1, limit=4
    $region2: #{tpu_custom_call.1} parent=1 // loop_pre_header
      _
    $region3: #{tpu_custom_call.1} parent=1 // loop_header
      %s18 = sphi 0, %s22
      %p19 = scmp.ge.s32.totalorder %s18, 4
      %s28 = sphi 0, %s30
      %s31 = sphi 0, %s28
      %s32 = sphi 0, %s31
      %s48 = sphi 0, %s32
      %s54 = sphi 0, %s56
      %s57 = sphi 0, %s54
      %s58 = sphi 0, %s57
      %s74 = sphi 0, %s58
      %s78 = sphi 0, %s78
      %s80 = sphi 0, %s78
      %s81 = sphi 0, %s80
      %s95 = sphi 0, %s81
      %s99 = sphi 0, %s99
      %s101 = sphi 0, %s99
      %s102 = sphi 0, %s101
      %s116 = sphi 0, %s102
      %s120 = sphi 0, %s120
      %s122 = sphi 0, %s120
      %s123 = sphi 0, %s122
      %s137 = sphi 0, %s123
      %s141 = sphi 0, %s141
      %s143 = sphi 0, %s141
      %s144 = sphi 0, %s143
      %s158 = sphi 0, %s144
      %s162 = sphi 0, %s162
      %s164 = sphi 0, %s162
      %s165 = sphi 0, %s164
      %s179 = sphi 0, %s165
      %s183 = sphi 0, %s183
      %s185 = sphi 0, %s183
      %s186 = sphi 0, %s185
      %s200 = sphi 0, %s186
      %s204 = sphi 0, %s204
      %s206 = sphi 0, %s204
      %s207 = sphi 0, %s206
      %s221 = sphi 0, %s207
      %s227 = sphi 0, %s229
      %s230 = sphi 0, %s227
      %s231 = sphi 0, %s230
      %s247 = sphi 0, %s231
    $region4: #{tpu_custom_call.1} parent=1 // loop_header_branch
      %21 = sbr.rel (%p19) target = $region8
    $region5: #{tpu_custom_call.1} parent=1 // loop_body
      %s23 = ssub.s32 %s18, 1
      %s24 = ssub.s32 %s18, 2
      %s25 = sadd.s32 %s18, 1
      %s26 = ssub.s32 %s18, %s25
      %p27 = scmp.eq.s32.totalorder %s26, 0
      %s29 = sadd.s32 %s28, 1
      %s30 = scalar_select %p27, %s28, %s29
      %p33 = pneg %p27
      %p34 = scmp.eq.s32.totalorder %s18, 1
      %p35 = por %p33, %p34
      %p36 = scmp.ne.s32.totalorder %s28, %s31
      %p37 = scmp.eq.s32.totalorder %s18, 0
      %p38 = por %p36, %p37
      %p39 = scmp.ne.s32.totalorder %s28, %s31
      %p40 = scmp.eq.s32.totalorder %s23, 1
      %p41 = por %p39, %p40
      %p42 = scmp.ne.s32.totalorder %s31, %s32
      %p43 = scmp.eq.s32.totalorder %s23, 0
      %p44 = por %p42, %p43
      %p45 = scmp.ne.s32.totalorder %s31, %s32
      %p46 = scmp.eq.s32.totalorder %s24, 1
      %p47 = por %p45, %p46
      %p49 = scmp.ne.s32.totalorder %s32, %s48
      %p50 = scmp.eq.s32.totalorder %s24, 0
      %p51 = por %p49, %p50
      %s52 = ssub.s32 %s18, %s25
      %p53 = scmp.eq.s32.totalorder %s52, 0
      %s55 = sadd.s32 %s54, 1
      %s56 = scalar_select %p53, %s54, %s55
      %p59 = pneg %p53
      %p60 = scmp.eq.s32.totalorder %s18, 1
      %p61 = por %p59, %p60
      %p62 = scmp.ne.s32.totalorder %s54, %s57
      %p63 = scmp.eq.s32.totalorder %s18, 0
      %p64 = por %p62, %p63
      %p65 = scmp.ne.s32.totalorder %s54, %s57
      %p66 = scmp.eq.s32.totalorder %s23, 1
      %p67 = por %p65, %p66
      %p68 = scmp.ne.s32.totalorder %s57, %s58
      %p69 = scmp.eq.s32.totalorder %s23, 0
      %p70 = por %p68, %p69
      %p71 = scmp.ne.s32.totalorder %s57, %s58
      %p72 = scmp.eq.s32.totalorder %s24, 1
      %p73 = por %p71, %p72
      %p75 = scmp.ne.s32.totalorder %s58, %s74
      %p76 = scmp.eq.s32.totalorder %s24, 0
      %p77 = por %p75, %p76
      %s79 = sadd.s32 %s78, 1
      %p82 = scmp.eq.s32.totalorder %s18, 1
      %p83 = scmp.ne.s32.totalorder %s78, %s80
      %p84 = scmp.eq.s32.totalorder %s18, 0
      %p85 = por %p83, %p84
      %p86 = scmp.ne.s32.totalorder %s78, %s80
      %p87 = scmp.eq.s32.totalorder %s23, 1
      %p88 = por %p86, %p87
      %p89 = scmp.ne.s32.totalorder %s80, %s81
      %p90 = scmp.eq.s32.totalorder %s23, 0
      %p91 = por %p89, %p90
      %p92 = scmp.ne.s32.totalorder %s80, %s81
      %p93 = scmp.eq.s32.totalorder %s24, 1
      %p94 = por %p92, %p93
      %p96 = scmp.ne.s32.totalorder %s81, %s95
      %p97 = scmp.eq.s32.totalorder %s24, 0
      %p98 = por %p96, %p97
      %s100 = sadd.s32 %s99, 1
      %p103 = scmp.eq.s32.totalorder %s18, 1
      %p104 = scmp.ne.s32.totalorder %s99, %s101
      %p105 = scmp.eq.s32.totalorder %s18, 0
      %p106 = por %p104, %p105
      %p107 = scmp.ne.s32.totalorder %s99, %s101
      %p108 = scmp.eq.s32.totalorder %s23, 1
      %p109 = por %p107, %p108
      %p110 = scmp.ne.s32.totalorder %s101, %s102
      %p111 = scmp.eq.s32.totalorder %s23, 0
      %p112 = por %p110, %p111
      %p113 = scmp.ne.s32.totalorder %s101, %s102
      %p114 = scmp.eq.s32.totalorder %s24, 1
      %p115 = por %p113, %p114
      %p117 = scmp.ne.s32.totalorder %s102, %s116
      %p118 = scmp.eq.s32.totalorder %s24, 0
      %p119 = por %p117, %p118
      %s121 = sadd.s32 %s120, 1
      %p124 = scmp.eq.s32.totalorder %s18, 1
      %p125 = scmp.ne.s32.totalorder %s120, %s122
      %p126 = scmp.eq.s32.totalorder %s18, 0
      %p127 = por %p125, %p126
      %p128 = scmp.ne.s32.totalorder %s120, %s122
      %p129 = scmp.eq.s32.totalorder %s23, 1
      %p130 = por %p128, %p129
      %p131 = scmp.ne.s32.totalorder %s122, %s123
      %p132 = scmp.eq.s32.totalorder %s23, 0
      %p133 = por %p131, %p132
      %p134 = scmp.ne.s32.totalorder %s122, %s123
      %p135 = scmp.eq.s32.totalorder %s24, 1
      %p136 = por %p134, %p135
      %p138 = scmp.ne.s32.totalorder %s123, %s137
      %p139 = scmp.eq.s32.totalorder %s24, 0
      %p140 = por %p138, %p139
      %s142 = sadd.s32 %s141, 1
      %p145 = scmp.eq.s32.totalorder %s18, 1
      %p146 = scmp.ne.s32.totalorder %s141, %s143
      %p147 = scmp.eq.s32.totalorder %s18, 0
      %p148 = por %p146, %p147
      %p149 = scmp.ne.s32.totalorder %s141, %s143
      %p150 = scmp.eq.s32.totalorder %s23, 1
      %p151 = por %p149, %p150
      %p152 = scmp.ne.s32.totalorder %s143, %s144
      %p153 = scmp.eq.s32.totalorder %s23, 0
      %p154 = por %p152, %p153
      %p155 = scmp.ne.s32.totalorder %s143, %s144
      %p156 = scmp.eq.s32.totalorder %s24, 1
      %p157 = por %p155, %p156
      %p159 = scmp.ne.s32.totalorder %s144, %s158
      %p160 = scmp.eq.s32.totalorder %s24, 0
      %p161 = por %p159, %p160
      %s163 = sadd.s32 %s162, 1
      %p166 = scmp.eq.s32.totalorder %s18, 1
      %p167 = scmp.ne.s32.totalorder %s162, %s164
      %p168 = scmp.eq.s32.totalorder %s18, 0
      %p169 = por %p167, %p168
      %p170 = scmp.ne.s32.totalorder %s162, %s164
      %p171 = scmp.eq.s32.totalorder %s23, 1
      %p172 = por %p170, %p171
      %p173 = scmp.ne.s32.totalorder %s164, %s165
      %p174 = scmp.eq.s32.totalorder %s23, 0
      %p175 = por %p173, %p174
      %p176 = scmp.ne.s32.totalorder %s164, %s165
      %p177 = scmp.eq.s32.totalorder %s24, 1
      %p178 = por %p176, %p177
      %p180 = scmp.ne.s32.totalorder %s165, %s179
      %p181 = scmp.eq.s32.totalorder %s24, 0
      %p182 = por %p180, %p181
      %s184 = sadd.s32 %s183, 1
      %p187 = scmp.eq.s32.totalorder %s18, 1
      %p188 = scmp.ne.s32.totalorder %s183, %s185
      %p189 = scmp.eq.s32.totalorder %s18, 0
      %p190 = por %p188, %p189
      %p191 = scmp.ne.s32.totalorder %s183, %s185
      %p192 = scmp.eq.s32.totalorder %s23, 1
      %p193 = por %p191, %p192
      %p194 = scmp.ne.s32.totalorder %s185, %s186
      %p195 = scmp.eq.s32.totalorder %s23, 0
      %p196 = por %p194, %p195
      %p197 = scmp.ne.s32.totalorder %s185, %s186
      %p198 = scmp.eq.s32.totalorder %s24, 1
      %p199 = por %p197, %p198
      %p201 = scmp.ne.s32.totalorder %s186, %s200
      %p202 = scmp.eq.s32.totalorder %s24, 0
      %p203 = por %p201, %p202
      %s205 = sadd.s32 %s204, 1
      %p208 = scmp.eq.s32.totalorder %s18, 1
      %p209 = scmp.ne.s32.totalorder %s204, %s206
      %p210 = scmp.eq.s32.totalorder %s18, 0
      %p211 = por %p209, %p210
      %p212 = scmp.ne.s32.totalorder %s204, %s206
      %p213 = scmp.eq.s32.totalorder %s23, 1
      %p214 = por %p212, %p213
      %p215 = scmp.ne.s32.totalorder %s206, %s207
      %p216 = scmp.eq.s32.totalorder %s23, 0
      %p217 = por %p215, %p216
      %p218 = scmp.ne.s32.totalorder %s206, %s207
      %p219 = scmp.eq.s32.totalorder %s24, 1
      %p220 = por %p218, %p219
      %p222 = scmp.ne.s32.totalorder %s207, %s221
      %p223 = scmp.eq.s32.totalorder %s24, 0
      %p224 = por %p222, %p223
      %s225 = ssub.s32 %s18, %s25
      %p226 = scmp.eq.s32.totalorder %s225, 0
      %s228 = sadd.s32 %s227, 1
      %s229 = scalar_select %p226, %s227, %s228
      %p232 = pneg %p226
      %p233 = scmp.eq.s32.totalorder %s18, 1
      %p234 = por %p232, %p233
      %p235 = scmp.ne.s32.totalorder %s227, %s230
      %p236 = scmp.eq.s32.totalorder %s18, 0
      %p237 = por %p235, %p236
      %p238 = scmp.ne.s32.totalorder %s227, %s230
      %p239 = scmp.eq.s32.totalorder %s23, 1
      %p240 = por %p238, %p239
      %p241 = scmp.ne.s32.totalorder %s230, %s231
      %p242 = scmp.eq.s32.totalorder %s23, 0
      %p243 = por %p241, %p242
      %p244 = scmp.ne.s32.totalorder %s230, %s231
      %p245 = scmp.eq.s32.totalorder %s24, 1
      %p246 = por %p244, %p245
      %p248 = scmp.ne.s32.totalorder %s231, %s247
      %p249 = scmp.eq.s32.totalorder %s24, 0
      %p250 = por %p248, %p249
      %p251 = scmp.le.s32.totalorder 1, %s18
      %p252 = scmp.lt.s32.totalorder %s18, 3
      %p253 = pnand %p251, %p252
      %p254 = pneg %p253
      // Predicated region
      $region9: #{tpu_custom_call.1} parent=5 // pred_check
        _
      $region10: #{tpu_custom_call.1} parent=5 // pred_check_branch
        %256 = sbr.rel (%p253) target = $region12
      $region11: #{tpu_custom_call.1} parent=5 // pred_region
        %s257 = ssub.s32 %s18, 1
        // Predicated region
        $region13: #{tpu_custom_call.1} parent=11 // pred_check
          %p258 = pneg %p91
        $region14: #{tpu_custom_call.1} parent=11 // pred_check_branch
          %260 = sbr.rel (%p258) target = $region16
        $region15: #{tpu_custom_call.1} parent=11 // pred_region
          _
        $region16: #{tpu_custom_call.1} parent=11 // pred_fallthru
          _
        // Predicated region
        $region17: #{tpu_custom_call.1} parent=11 // pred_check
          %p261 = pneg %p112
        $region18: #{tpu_custom_call.1} parent=11 // pred_check_branch
          %263 = sbr.rel (%p261) target = $region20
        $region19: #{tpu_custom_call.1} parent=11 // pred_region
          _
        $region20: #{tpu_custom_call.1} parent=11 // pred_fallthru
          _
        // Predicated region
        $region21: #{tpu_custom_call.1} parent=11 // pred_check
          %p264 = pneg %p133
        $region22: #{tpu_custom_call.1} parent=11 // pred_check_branch
          %266 = sbr.rel (%p264) target = $region24
        $region23: #{tpu_custom_call.1} parent=11 // pred_region
          _
        $region24: #{tpu_custom_call.1} parent=11 // pred_fallthru
          _
        // Predicated region
        $region25: #{tpu_custom_call.1} parent=11 // pred_check
          %p267 = pneg %p154
        $region26: #{tpu_custom_call.1} parent=11 // pred_check_branch
          %269 = sbr.rel (%p267) target = $region28
        $region27: #{tpu_custom_call.1} parent=11 // pred_region
          _
        $region28: #{tpu_custom_call.1} parent=11 // pred_fallthru
          _
        // Predicated region
        $region29: #{tpu_custom_call.1} parent=11 // pred_check
          %p270 = pneg %p175
        $region30: #{tpu_custom_call.1} parent=11 // pred_check_branch
          %272 = sbr.rel (%p270) target = $region32
        $region31: #{tpu_custom_call.1} parent=11 // pred_region
          _
        $region32: #{tpu_custom_call.1} parent=11 // pred_fallthru
          _
        // Predicated region
        $region33: #{tpu_custom_call.1} parent=11 // pred_check
          %p273 = pneg %p196
        $region34: #{tpu_custom_call.1} parent=11 // pred_check_branch
          %275 = sbr.rel (%p273) target = $region36
        $region35: #{tpu_custom_call.1} parent=11 // pred_region
          _
        $region36: #{tpu_custom_call.1} parent=11 // pred_fallthru
          _
        // Predicated region
        $region37: #{tpu_custom_call.1} parent=11 // pred_check
          %p276 = pneg %p217
        $region38: #{tpu_custom_call.1} parent=11 // pred_check_branch
          %278 = sbr.rel (%p276) target = $region40
        $region39: #{tpu_custom_call.1} parent=11 // pred_region
          _
        $region40: #{tpu_custom_call.1} parent=11 // pred_fallthru
          _
      $region12: #{tpu_custom_call.1} parent=5 // pred_fallthru
        _
      %p279 = scmp.lt.s32.totalorder %s18, 2
      // Predicated region
      $region41: #{tpu_custom_call.1} parent=5 // pred_check
        %p280 = pneg %p279
      $region42: #{tpu_custom_call.1} parent=5 // pred_check_branch
        %282 = sbr.rel (%p280) target = $region44
      $region43: #{tpu_custom_call.1} parent=5 // pred_region
        // Predicated region
        $region45: #{tpu_custom_call.1} parent=43 // pred_check
          %p283 = pneg %p38
        $region46: #{tpu_custom_call.1} parent=43 // pred_check_branch
          %285 = sbr.rel (%p283) target = $region48
        $region47: #{tpu_custom_call.1} parent=43 // pred_region
          %s286 = smul.u32 2, %s18
          %p287 = scmp.lt.s32.totalorder %s286, 3
          %s288 = scalar_select %p287, %s286, 3
          %s289 = smul.addr %s288, 8
          %s290 = scalar_lea.vmem %s0, %s289
          %s291 = smul.u32 2, %s18
        $region48: #{tpu_custom_call.1} parent=43 // pred_fallthru
          _
        // Predicated region
        $region49: #{tpu_custom_call.1} parent=43 // pred_check
          %p292 = pneg %p64
        $region50: #{tpu_custom_call.1} parent=43 // pred_check_branch
          %294 = sbr.rel (%p292) target = $region52
        $region51: #{tpu_custom_call.1} parent=43 // pred_region
          %s295 = smul.u32 2, %s18
          %p296 = scmp.lt.s32.totalorder %s295, 3
          %s297 = scalar_select %p296, %s295, 3
          %s298 = smul.addr %s297, 4
          %s299 = scalar_lea.vmem %s1, %s298
          %s300 = smul.u32 2, %s18
        $region52: #{tpu_custom_call.1} parent=43 // pred_fallthru
          _
      $region44: #{tpu_custom_call.1} parent=5 // pred_fallthru
        _
      %p301 = scmp.le.s32.totalorder 1, %s18
      %p302 = scmp.lt.s32.totalorder %s18, 3
      %p303 = pnand %p301, %p302
      %p304 = pneg %p303
      // Predicated region
      $region53: #{tpu_custom_call.1} parent=5 // pred_check
        _
      $region54: #{tpu_custom_call.1} parent=5 // pred_check_branch
        %306 = sbr.rel (%p303) target = $region56
      $region55: #{tpu_custom_call.1} parent=5 // pred_region
        %s307 = ssub.s32 %s18, 1
        %s308 = smul.u32 2, %s23
        %p309 = scmp.lt.s32.totalorder %s308, 3
        %s310 = scalar_select %p309, %s308, 3
        %s311 = smul.addr %s310, 8
        %s312 = scalar_lea.vmem %s0, %s311
        %p313 = pneg %p44
        %p314 = pneg %p41
        %s315 = smul.u32 2, %s23
        %p316 = scmp.lt.s32.totalorder %s315, 3
        %s317 = scalar_select %p316, %s315, 3
        %s318 = smul.addr %s317, 4
        %s319 = scalar_lea.vmem %s1, %s318
        %p320 = pneg %p70
        %p321 = pneg %p67
        %p322 = pneg %p91
        %p323 = pneg %p88
        %p324 = pneg %p112
        %p325 = pneg %p109
        %p326 = pneg %p133
        %p327 = pneg %p130
        %p328 = pneg %p154
        %p329 = pneg %p151
        %p330 = pneg %p175
        %p331 = pneg %p172
        %p332 = pneg %p196
        %p333 = pneg %p193
        %p334 = pneg %p217
        %p335 = pneg %p214
        %p336 = pneg %p243
        %p337 = pneg %p240
        %s338 = sand.u32 %s230, 1
        %s339 = scalar_lea.sflag [#allocation3], %s338
        %s340 = sand.u32 %s230, 1
        %s341 = smul.addr %s340, 16
        %s342 = scalar_lea.vmem [#allocation2], %s341
        %s343 = smul.u32 2, %s23
        %p344 = scmp.lt.s32.totalorder %s343, 3
        %s345 = scalar_select %p344, %s343, 3
        %s346 = smul.addr %s345, 8
        %s347 = scalar_lea.vmem %s0, %s346
        %s348 = smul.u32 2, %s23
        %s349 = smul.u32 2, %s23
        %p350 = scmp.lt.s32.totalorder %s349, 3
        %s351 = scalar_select %p350, %s349, 3
        %s352 = smul.addr %s351, 4
        %s353 = scalar_lea.vmem %s1, %s352
        %s354 = smul.u32 2, %s23
        %s355 = smul.u32 2, %s23
        %v357 = vld [vmem:[%s4] sm:$0x1]
        %v358 = vld [vmem:[%s2] sm:$0x1]
        %v359 = vld [vmem:[%s347] sm:$0xff]
        %v360 = vld [vmem:[%s347 + $0x8] sm:$0xff]
        %v362 = vlaneseq
        %v363 = vshrl.u32 %v362, 7
        %v364 = vsub.s32 0, %v363
        %v365 = vrot.slane %v358, %v364
        %368 = vset.pattern.permute.xlu0 0
        %369 = vperm.xlu0 %368, %v359
        %v370 = vpop.permute.xlu0 %369
        %373 = vset.pattern.permute.xlu0 0
        %374 = vperm.xlu0 %373, %v360
        %v375 = vpop.permute.xlu0 %374
        %v377 = vmul.f32 %v365, %v370
        %v378 = vmul.f32 %v365, %v375
        %v379 = vld [vmem:[%s3] sm:$0x1]
        %v381 = vlaneseq
        %v382 = vshrl.u32 %v381, 7
        %v383 = vsub.s32 0, %v382
        %v384 = vrot.slane %v379, %v383
        %v386 = vadd.f32 %v377, %v384
        %v387 = vadd.f32 %v378, %v384
        %v388 = vand.u32 2147483647, %v386
        %vm389 = vcmp.le.f32.partialorder %v388, 0.7853982
        %vm390 = vcmp.lt.s32.totalorder %v386, 0
        %v391 = vand.u32 %v386, 2139095040
        %v392 = vshrl.u32 %v391, 23
        %v393 = vsub.s32 %v392, 127
        %v394 = vand.u32 2147483647, %v386
        %v395 = vand.u32 %v394, 8388607
        %v396 = vor.u32 %v395, 8388608
        %v397 = vsub.s32 0, %v396
        %v398 = vadd.s32 %v393, 1
        %vm399 = vcmp.gt.s32.totalorder %v398, 0
        %v400 = vsel %vm399, %v398, 0
        %v401 = vshrl.u32 %v400, 5
        %v402 = vand.u32 %v400, 31
        %v403 = vsub.s32 32, %v402
        %v404 = vshrl.u32 683565275, %v403
        %v405 = vshll.u32 683565275, %v402
        %v406 = vshrl.u32 2475754826, %v403
        %v407 = vor.u32 %v405, %v406
        %v408 = vshll.u32 2475754826, %v402
        %v409 = vshrl.u32 2131351028, %v403
        %v410 = vor.u32 %v408, %v409
        %v411 = vshll.u32 2131351028, %v402
        %v412 = vshrl.u32 2102212464, %v403
        %v413 = vor.u32 %v411, %v412
        %v414 = vshll.u32 2102212464, %v402
        %v415 = vshrl.u32 920167782, %v403
        %v416 = vor.u32 %v414, %v415
        %v417 = vshll.u32 920167782, %v402
        %v418 = vshrl.u32 1326507024, %v403
        %v419 = vor.u32 %v417, %v418
        %vm420 = vcmp.lt.s32.totalorder %v401, 1
        %vm421 = vcmp.lt.s32.totalorder %v401, 2
        %vm422 = vcmp.lt.s32.totalorder %v401, 3
        %vm423 = vcmp.lt.s32.totalorder %v401, 4
        %v424 = vsel %vm420, %v404, %v407
        %v425 = vsel %vm423, %v413, 2102212464
        %v426 = vsel %vm422, %v410, %v425
        %v427 = vsel %vm421, %v424, %v426
        %v428 = vsel %vm420, %v407, %v410
        %v429 = vsel %vm423, %v416, 920167782
        %v430 = vsel %vm422, %v413, %v429
        %v431 = vsel %vm421, %v428, %v430
        %v432 = vsel %vm420, %v410, %v413
        %v433 = vsel %vm423, %v419, 1326507024
        %v434 = vsel %vm422, %v416, %v433
        %v435 = vsel %vm421, %v432, %v434
        %v436 = vshll.u32 %v396, 8
        %v437 = vmul.u32.u64.compose %v436, %v435
        %v438 = vextract.low.u32 %v437
        %v439 = vextract.high.u32 %v437
        %v440 = vmul.u32.u64.compose %v436, %v431
        %v441 = vextract.low.u32 %v440
        %v442 = vextract.high.u32 %v440
        %v443 = vmul.u32 %v436, %v427
        %v444 = vadd.s32 %v439, %v441
        %vm445 = vc.u32 %v439, %v441
        %v446 = vadd.s32 %v442, 1
        %v447 = vsel %vm445, %v446, %v442
        %v448 = vadd.s32 %v443, %v447
        %v449 = vadd.s32 %v448, 536870912
        %v450 = vshrl.u32 %v449, 30
        %v451 = vshll.u32 %v450, 30
        %v452 = vsub.s32 %v448, %v451
        %vm453 = vcmp.lt.s32.totalorder %v452, 0
        %v454 = vsub.s32 0, %v452
        %v455 = vsel %vm453, %v454, %v452
        %v456 = vclz %v455
        %v457 = vsub.s32 %v456, 2
        %vm458 = vcmp.gt.s32.totalorder 0, %v457
        %v459 = vsel %vm458, 0, %v457
        %v460 = vsub.s32 32, %v459
        %v461 = vshll.u32 %v452, %v459
        %v462 = vshrl.u32 %v444, %v460
        %v463 = vor.u32 %v461, %v462
        %v464 = vsub.s32 4294967266, %v459
        %v465 = vadd.s32 %v464, 127
        %v466 = vshll.u32 %v465, 23
        %v467 = vor.u32 4788187, %v466
        %v468 = vand.u32 2147483647, %v467
        %v470 = vcvt.s32.f32 %v463
        %v471 = vmul.f32 %v470, %v468
        %v472 = vxor.u32 %v471, 2147483648
        %v473 = vsel %vm390, %v472, %v471
        %v474 = vsub.s32 4, %v450
        %v475 = vsel %vm390, %v474, %v450
        %v476 = vsel %vm389, %v386, %v473
        %v477 = vsel %vm389, 0, %v475
        %v478 = vcosq.f32.pop %v476
        %v479 = vsinq.f32.pop %v476
        %vm480 = vweird.f32 %v386
        %v481 = vadd.s32 %v477, 3
        %v482 = vand.u32 %v481, 3
        %vm483 = vcmp.lt.s32.totalorder %v482, 2
        %vm484 = vcmp.eq.s32.totalorder %v482, 0
        %v485 = vxor.u32 %v479, 2147483648
        %v486 = vsel %vm484, %v478, %v485
        %vm487 = vcmp.eq.s32.totalorder %v482, 2
        %v488 = vxor.u32 %v478, 2147483648
        %v489 = vsel %vm487, %v488, %v479
        %v490 = vsel %vm483, %v486, %v489
        %v491 = vsel %vm480, nan, %v490
        %v492 = vand.u32 2147483647, %v387
        %vm493 = vcmp.le.f32.partialorder %v492, 0.7853982
        %vm494 = vcmp.lt.s32.totalorder %v387, 0
        %v495 = vand.u32 %v387, 2139095040
        %v496 = vshrl.u32 %v495, 23
        %v497 = vsub.s32 %v496, 127
        %v498 = vand.u32 2147483647, %v387
        %v499 = vand.u32 %v498, 8388607
        %v500 = vor.u32 %v499, 8388608
        %v501 = vsub.s32 0, %v500
        %v502 = vadd.s32 %v497, 1
        %vm503 = vcmp.gt.s32.totalorder %v502, 0
        %v504 = vsel %vm503, %v502, 0
        %v505 = vshrl.u32 %v504, 5
        %v506 = vand.u32 %v504, 31
        %v507 = vsub.s32 32, %v506
        %v508 = vshrl.u32 683565275, %v507
        %v509 = vshll.u32 683565275, %v506
        %v510 = vshrl.u32 2475754826, %v507
        %v511 = vor.u32 %v509, %v510
        %v512 = vshll.u32 2475754826, %v506
        %v513 = vshrl.u32 2131351028, %v507
        %v514 = vor.u32 %v512, %v513
        %v515 = vshll.u32 2131351028, %v506
        %v516 = vshrl.u32 2102212464, %v507
        %v517 = vor.u32 %v515, %v516
        %v518 = vshll.u32 2102212464, %v506
        %v519 = vshrl.u32 920167782, %v507
        %v520 = vor.u32 %v518, %v519
        %v521 = vshll.u32 920167782, %v506
        %v522 = vshrl.u32 1326507024, %v507
        %v523 = vor.u32 %v521, %v522
        %vm524 = vcmp.lt.s32.totalorder %v505, 1
        %vm525 = vcmp.lt.s32.totalorder %v505, 2
        %vm526 = vcmp.lt.s32.totalorder %v505, 3
        %vm527 = vcmp.lt.s32.totalorder %v505, 4
        %v528 = vsel %vm524, %v508, %v511
        %v529 = vsel %vm527, %v517, 2102212464
        %v530 = vsel %vm526, %v514, %v529
        %v531 = vsel %vm525, %v528, %v530
        %v532 = vsel %vm524, %v511, %v514
        %v533 = vsel %vm527, %v520, 920167782
        %v534 = vsel %vm526, %v517, %v533
        %v535 = vsel %vm525, %v532, %v534
        %v536 = vsel %vm524, %v514, %v517
        %v537 = vsel %vm527, %v523, 1326507024
        %v538 = vsel %vm526, %v520, %v537
        %v539 = vsel %vm525, %v536, %v538
        %v540 = vshll.u32 %v500, 8
        %v541 = vmul.u32.u64.compose %v540, %v539
        %v542 = vextract.low.u32 %v541
        %v543 = vextract.high.u32 %v541
        %v544 = vmul.u32.u64.compose %v540, %v535
        %v545 = vextract.low.u32 %v544
        %v546 = vextract.high.u32 %v544
        %v547 = vmul.u32 %v540, %v531
        %v548 = vadd.s32 %v543, %v545
        %vm549 = vc.u32 %v543, %v545
        %v550 = vadd.s32 %v546, 1
        %v551 = vsel %vm549, %v550, %v546
        %v552 = vadd.s32 %v547, %v551
        %v553 = vadd.s32 %v552, 536870912
        %v554 = vshrl.u32 %v553, 30
        %v555 = vshll.u32 %v554, 30
        %v556 = vsub.s32 %v552, %v555
        %vm557 = vcmp.lt.s32.totalorder %v556, 0
        %v558 = vsub.s32 0, %v556
        %v559 = vsel %vm557, %v558, %v556
        %v560 = vclz %v559
        %v561 = vsub.s32 %v560, 2
        %vm562 = vcmp.gt.s32.totalorder 0, %v561
        %v563 = vsel %vm562, 0, %v561
        %v564 = vsub.s32 32, %v563
        %v565 = vshll.u32 %v556, %v563
        %v566 = vshrl.u32 %v548, %v564
        %v567 = vor.u32 %v565, %v566
        %v568 = vsub.s32 4294967266, %v563
        %v569 = vadd.s32 %v568, 127
        %v570 = vshll.u32 %v569, 23
        %v571 = vor.u32 4788187, %v570
        %v572 = vand.u32 2147483647, %v571
        %v574 = vcvt.s32.f32 %v567
        %v575 = vmul.f32 %v574, %v572
        %v576 = vxor.u32 %v575, 2147483648
        %v577 = vsel %vm494, %v576, %v575
        %v578 = vsub.s32 4, %v554
        %v579 = vsel %vm494, %v578, %v554
        %v580 = vsel %vm493, %v387, %v577
        %v581 = vsel %vm493, 0, %v579
        %v582 = vcosq.f32.pop %v580
        %v583 = vsinq.f32.pop %v580
        %vm584 = vweird.f32 %v387
        %v585 = vadd.s32 %v581, 3
        %v586 = vand.u32 %v585, 3
        %vm587 = vcmp.lt.s32.totalorder %v586, 2
        %vm588 = vcmp.eq.s32.totalorder %v586, 0
        %v589 = vxor.u32 %v583, 2147483648
        %v590 = vsel %vm588, %v582, %v589
        %vm591 = vcmp.eq.s32.totalorder %v586, 2
        %v592 = vxor.u32 %v582, 2147483648
        %v593 = vsel %vm591, %v592, %v583
        %v594 = vsel %vm587, %v590, %v593
        %v595 = vsel %vm584, nan, %v594
        %v597 = vlaneseq
        %v598 = vshrl.u32 %v597, 7
        %v599 = vsub.s32 0, %v598
        %v600 = vrot.slane %v357, %v599
        %v602 = vmul.f32 %v600, %v491
        %v603 = vmul.f32 %v600, %v595
        %v604 = vpack.c.bf16 %v603, %v602
        %v605 = vld [vmem:[%s5] sm:$0xf]
        %vm606 = vcmask 64512
        %v608 = vsel %vm606, %v604, 0
        %vm610 = vcmask 1043456
        %v612 = vsel %vm610, %v605, 0
        %614 = vmatprep.subr.bf16.mxu0 0
        %615 = vmatpush1.bf16.msra.mxu0 %v612
        %616 = vmatprep.subr.bf16.mxu0 0
        %617 = vmatpush1.bf16.msra.mxu0 0
        %618 = vmatprep.subr.bf16.mxu0 0
        %619 = vmatpush1.bf16.msra.mxu0 0
        %620 = vmatprep.subr.bf16.mxu0 0
        %621 = vmatpush1.bf16.msra.mxu0 0
        %622 = vmatprep.subr.bf16.mxu0 0
        %623 = vmatpush1.bf16.msra.mxu0 0
        %624 = vmatprep.subr.bf16.mxu0 0
        %625 = vmatpush1.bf16.msra.mxu0 0
        %626 = vmatprep.subr.bf16.mxu0 0
        %627 = vmatpush1.bf16.msra.mxu0 0
        %628 = vmatprep.subr.bf16.mxu0 0
        %629 = vmatpush1.bf16.msra.mxu0 0
        %630 = vmatprep.subr.bf16.mxu0 0
        %631 = vmatpush1.bf16.msra.mxu0 0
        %632 = vmatprep.subr.bf16.mxu0 0
        %633 = vmatpush1.bf16.msra.mxu0 0
        %634 = vmatprep.subr.bf16.mxu0 0
        %635 = vmatpush1.bf16.msra.mxu0 0
        %636 = vmatprep.subr.bf16.mxu0 0
        %637 = vmatpush1.bf16.msra.mxu0 0
        %638 = vmatprep.subr.bf16.mxu0 0
        %639 = vmatpush1.bf16.msra.mxu0 0
        %640 = vmatprep.subr.bf16.mxu0 0
        %641 = vmatpush1.bf16.msra.mxu0 0
        %642 = vmatprep.subr.bf16.mxu0 0
        %643 = vmatpush1.bf16.msra.mxu0 0
        %644 = vmatprep.subr.bf16.mxu0 0
        %645 = vmatpush1.bf16.msra.mxu0 0
        %646 = vmatprep.mubr.bf16.mxu0 0
        %647 = vmatmul.mubr.bf16.gmra.mrb[0].mxu0 %v608
        %v648 = vpop.f32.mrb[0].mxu0
        %v649 = vadd.f32 0.0, %v648
        %v650 = vpop.f32.mrb[0].mxu0
        %v651 = vpop.f32.mrb[0].mxu0
        %v652 = vadd.f32 0.0, %v651
        %v653 = vpop.f32.mrb[0].mxu0
        %654 = vdwg.mxu0
        %v655 = vld [vmem:[%s6] sm:$0xf]
        %v657 = vsel %vm610, %v655, 0
        %659 = vmatprep.subr.bf16.mxu0 0
        %660 = vmatpush1.bf16.msra.mxu0 %v657
        %661 = vmatprep.subr.bf16.mxu0 0
        %662 = vmatpush1.bf16.msra.mxu0 0
        %663 = vmatprep.subr.bf16.mxu0 0
        %664 = vmatpush1.bf16.msra.mxu0 0
        %665 = vmatprep.subr.bf16.mxu0 0
        %666 = vmatpush1.bf16.msra.mxu0 0
        %667 = vmatprep.subr.bf16.mxu0 0
        %668 = vmatpush1.bf16.msra.mxu0 0
        %669 = vmatprep.subr.bf16.mxu0 0
        %670 = vmatpush1.bf16.msra.mxu0 0
        %671 = vmatprep.subr.bf16.mxu0 0
        %672 = vmatpush1.bf16.msra.mxu0 0
        %673 = vmatprep.subr.bf16.mxu0 0
        %674 = vmatpush1.bf16.msra.mxu0 0
        %675 = vmatprep.subr.bf16.mxu0 0
        %676 = vmatpush1.bf16.msra.mxu0 0
        %677 = vmatprep.subr.bf16.mxu0 0
        %678 = vmatpush1.bf16.msra.mxu0 0
        %679 = vmatprep.subr.bf16.mxu0 0
        %680 = vmatpush1.bf16.msra.mxu0 0
        %681 = vmatprep.subr.bf16.mxu0 0
        %682 = vmatpush1.bf16.msra.mxu0 0
        %683 = vmatprep.subr.bf16.mxu0 0
        %684 = vmatpush1.bf16.msra.mxu0 0
        %685 = vmatprep.subr.bf16.mxu0 0
        %686 = vmatpush1.bf16.msra.mxu0 0
        %687 = vmatprep.subr.bf16.mxu0 0
        %688 = vmatpush1.bf16.msra.mxu0 0
        %689 = vmatprep.subr.bf16.mxu0 0
        %690 = vmatpush1.bf16.msra.mxu0 0
        %691 = vmatprep.mubr.bf16.mxu0 0
        %692 = vmatmul.mubr.bf16.gmra.mrb[0].mxu0 %v608
        %v693 = vpop.f32.mrb[0].mxu0
        %v694 = vadd.f32 0.0, %v693
        %v695 = vpop.f32.mrb[0].mxu0
        %v696 = vpop.f32.mrb[0].mxu0
        %v697 = vadd.f32 0.0, %v696
        %v698 = vpop.f32.mrb[0].mxu0
        %699 = vdwg.mxu0
        %v700 = vtanh.pop %v649
        %v701 = vtanh.pop %v652
        %v702 = vld [vmem:[%s353] sm:$0xf]
        %v703 = vld [vmem:[%s353 + $0x4] sm:$0xf]
        %v704 = vunpack.c.l.bf16 %v702
        %v705 = vunpack.c.l.bf16 %v703
        %v706 = vmul.f32 %v700, %v704
        %v707 = vmul.f32 %v701, %v705
        %v708 = vadd.f32 %v706, %v694
        %v709 = vadd.f32 %v707, %v697
        %v710 = vlaneseq
        %v711 = vshrl.u32 %v710, 7
        %v712 = vadd.s32 %v711, 8
        %vm713 = vcmp.lt.s32.totalorder %v711, 0
        %v714 = vsub.s32 0, %v711
        %v715 = vsel %vm713, %v714, %v711
        %v716 = vshrl.u32 %v715, 3
        %v717 = vand.u32 %v715, 7
        %v718 = vsub.s32 0, %v717
        %v719 = vsel %vm713, %v718, %v717
        %vm720 = vcmp.lt.s32.totalorder %v712, 0
        %v721 = vsub.s32 0, %v712
        %v722 = vsel %vm720, %v721, %v712
        %v723 = vshrl.u32 %v722, 3
        %v724 = vand.u32 %v722, 7
        %v725 = vsub.s32 0, %v724
        %v726 = vsel %vm720, %v725, %v724
        %vm727 = vcmp.ne.s32.totalorder %v719, 0
        %vm728 = vcmp.ne.s32.totalorder %v726, 0
        %vm729 = vcmp.lt.s32.totalorder %v719, 0
        %vm730 = vcmp.lt.s32.totalorder %v726, 0
        %vm731 = vmand %vm729, %vm727
        %vm732 = vmand %vm730, %vm728
        %v733 = vadd.s32 %v719, 8
        %v734 = vadd.s32 %v726, 8
        %v735 = vsel %vm731, %v733, %v719
        %v736 = vsel %vm732, %v734, %v726
        %v738 = vrot.slane %v709, 6
        %vm741 = vcmask 1041408
        %v742 = vrot.slane %v708, 6
        %v743 = vsel %vm741, %v742, %v738
        %v746 = vsel %vm741, %v738, %v742
        %vm747 = vcmp.ge.s32.totalorder %v735, 2
        %vm748 = vcmp.ge.s32.totalorder %v736, 2
        %v749 = vsel %vm747, 1, 0
        %v750 = vsel %vm748, 1, 0
        %vm751 = vcmp.eq.s32.totalorder %v749, 1
        %vm752 = vcmp.eq.s32.totalorder %v750, 1
        %v753 = vsel %vm751, %v746, 0.0
        %v754 = vsel %vm752, %v743, 0.0
        %v755 = vrot.slane %v709, 7
        %vm757 = vcmask 1040384
        %v758 = vrot.slane %v708, 7
        %v759 = vsel %vm757, %v758, %v755
        %v762 = vsel %vm757, %v755, %v758
        %vm763 = vcmp.ge.s32.totalorder %v735, 1
        %vm764 = vcmp.ge.s32.totalorder %v736, 1
        %v765 = vsel %vm763, 1, 0
        %v766 = vsel %vm764, 1, 0
        %vm767 = vcmp.eq.s32.totalorder %v765, 1
        %vm768 = vcmp.eq.s32.totalorder %v766, 1
        %v769 = vsel %vm767, %v762, 0.0
        %v770 = vsel %vm768, %v759, 0.0
        %773 = vrot.lane.b32.xlu0 %v769, 32
        %v774 = vpop.permute.xlu0 %773
        %775 = vrot.lane.b32.xlu0 %v770, 32
        %v776 = vpop.permute.xlu0 %775
        %779 = vrot.lane.b32.xlu0 %v708, 64
        %v780 = vpop.permute.xlu0 %779
        %781 = vrot.lane.b32.xlu0 %v709, 64
        %v782 = vpop.permute.xlu0 %781
        %vm785 = vcmask 261120
        %v786 = vsel %vm785, %v753, %v774
        %v787 = vsel %vm785, %v754, %v776
        %vm788 = vcmask 523264
        %v789 = vsel %vm788, %v786, %v780
        %v790 = vsel %vm788, %v787, %v782
        %v791 = vpack.c.bf16 %v790, %v789
        %v792 = vld [vmem:[%s7] sm:$0xf]
        %v793 = vld [vmem:[%s7 + $0x4] sm:$0xf]
        %v794 = vld [vmem:[%s7 + $0x8] sm:$0xf]
        %v795 = vld [vmem:[%s7 + $0xc] sm:$0xf]
        %v796 = vld [vmem:[%s7 + $0x10] sm:$0xf]
        %v797 = vld [vmem:[%s7 + $0x14] sm:$0xf]
        %v798 = vld [vmem:[%s7 + $0x18] sm:$0xf]
        %v799 = vld [vmem:[%s7 + $0x1c] sm:$0xf]
        %v800 = vld [vmem:[%s7 + $0x20] sm:$0xf]
        %v801 = vld [vmem:[%s7 + $0x24] sm:$0xf]
        %v802 = vld [vmem:[%s7 + $0x28] sm:$0xf]
        %v803 = vld [vmem:[%s7 + $0x2c] sm:$0xf]
        %v804 = vld [vmem:[%s8] sm:$0x1]
        %v806 = vlaneseq
        %v807 = vshrl.u32 %v806, 7
        %v808 = vsub.s32 0, %v807
        %v809 = vrot.slane %v804, %v808
        %v823 = vunpack.c.l.b16 %v792
        %v824 = vunpack.c.l.b16 %v793
        %v825 = vunpack.c.l.b16 %v794
        %v826 = vunpack.c.l.b16 %v795
        %v827 = vunpack.c.l.b16 %v796
        %v828 = vunpack.c.l.b16 %v797
        %v829 = vunpack.c.l.b16 %v798
        %v830 = vunpack.c.l.b16 %v799
        %v831 = vunpack.c.l.b16 %v800
        %v832 = vunpack.c.l.b16 %v801
        %v833 = vunpack.c.l.b16 %v802
        %v834 = vunpack.c.l.b16 %v803
        %v835 = vpack.c.b16 %v824, %v823
        %v836 = vpack.c.b16 %v826, %v825
        %v837 = vpack.c.b16 %v828, %v827
        %v838 = vpack.c.b16 %v830, %v829
        %v839 = vpack.c.b16 %v832, %v831
        %v840 = vpack.c.b16 %v834, %v833
        %vm847 = vcmask 785408
        %v849 = vsel %vm847, %v791, 0
        %851 = vmatprep.subr.bf16.mxu0 0
        %852 = vmatpush1.bf16.msra.mxu0 %v835
        %853 = vmatprep.subr.bf16.mxu0 0
        %854 = vmatpush1.bf16.msra.mxu0 %v836
        %855 = vmatprep.subr.bf16.mxu0 0
        %856 = vmatpush1.bf16.msra.mxu0 %v837
        %857 = vmatprep.subr.bf16.mxu0 0
        %858 = vmatpush1.bf16.msra.mxu0 %v838
        %859 = vmatprep.subr.bf16.mxu0 0
        %860 = vmatpush1.bf16.msra.mxu0 %v839
        %861 = vmatprep.subr.bf16.mxu0 0
        %862 = vmatpush1.bf16.msra.mxu0 %v840
        %863 = vmatprep.subr.bf16.mxu0 0
        %864 = vmatpush1.bf16.msra.mxu0 0
        %865 = vmatprep.subr.bf16.mxu0 0
        %866 = vmatpush1.bf16.msra.mxu0 0
        %867 = vmatprep.subr.bf16.mxu0 0
        %868 = vmatpush1.bf16.msra.mxu0 0
        %869 = vmatprep.subr.bf16.mxu0 0
        %870 = vmatpush1.bf16.msra.mxu0 0
        %871 = vmatprep.subr.bf16.mxu0 0
        %872 = vmatpush1.bf16.msra.mxu0 0
        %873 = vmatprep.subr.bf16.mxu0 0
        %874 = vmatpush1.bf16.msra.mxu0 0
        %875 = vmatprep.subr.bf16.mxu0 0
        %876 = vmatpush1.bf16.msra.mxu0 0
        %877 = vmatprep.subr.bf16.mxu0 0
        %878 = vmatpush1.bf16.msra.mxu0 0
        %879 = vmatprep.subr.bf16.mxu0 0
        %880 = vmatpush1.bf16.msra.mxu0 0
        %881 = vmatprep.subr.bf16.mxu0 0
        %882 = vmatpush1.bf16.msra.mxu0 0
        %883 = vmatprep.mubr.bf16.mxu0 0
        %884 = vmatmul.mubr.bf16.gmra.mrb[0].mxu0 %v849
        %v885 = vpop.f32.mrb[0].mxu0
        %v886 = vadd.f32 %v809, %v885
        %v887 = vpop.f32.mrb[0].mxu0
        %v888 = vpop.f32.mrb[0].mxu0
        %v889 = vadd.f32 %v809, %v888
        %v890 = vpop.f32.mrb[0].mxu0
        %891 = vdwg.mxu0
        %v892 = vmax.f32 %v886, 0.0
        %v893 = vmax.f32 %v889, 0.0
        %894 = vst.msk [vmem:[%s342] sm:$0xff] %vm785, %v892
        %895 = vst.msk [vmem:[%s342 + $0x8] sm:$0xff] %vm785, %v893
        %s896 = sand.u32 %s230, 1
        %s897 = scalar_lea.sflag [#allocation3], %s896
        %s898 = sand.u32 %s230, 1
        %s899 = smul.addr %s898, 16
        %s900 = scalar_lea.vmem [#allocation2], %s899
        // Predicated region
        $region57: #{tpu_custom_call.1} parent=55 // pred_check
          %p901 = pneg %p240
        $region58: #{tpu_custom_call.1} parent=55 // pred_check_branch
          %903 = sbr.rel (%p901) target = $region60
        $region59: #{tpu_custom_call.1} parent=55 // pred_region
          %s904 = smul.u32 2, %s23
          %s906 = ssub.s32 256, 256
          %907 = vsyncadd %s897, %s906
          %s908 = smul.addr %s904, 128
          %s909 = scalar_lea.hbm %s9, %s908
          %s910 = sshll.u32 %s900, 4
          %s911 = int_to_ptr.vmem [resolvable:$true] %s910
          %916 = dma.vmem_to_hbm [thread:$0]  %s911, 256, %s909, %s897, 128, 128, 8
        $region60: #{tpu_custom_call.1} parent=55 // pred_fallthru
          _
      $region56: #{tpu_custom_call.1} parent=5 // pred_fallthru
        _
      %p917 = scmp.le.s32.totalorder 2, %s18
      // Predicated region
      $region61: #{tpu_custom_call.1} parent=5 // pred_check
        %p918 = pneg %p917
      $region62: #{tpu_custom_call.1} parent=5 // pred_check_branch
        %920 = sbr.rel (%p918) target = $region64
      $region63: #{tpu_custom_call.1} parent=5 // pred_region
        %s921 = ssub.s32 %s18, 2
        // Predicated region
        $region65: #{tpu_custom_call.1} parent=63 // pred_check
          %p922 = pneg %p246
        $region66: #{tpu_custom_call.1} parent=63 // pred_check_branch
          %924 = sbr.rel (%p922) target = $region68
        $region67: #{tpu_custom_call.1} parent=63 // pred_region
          %s925 = sand.u32 %s231, 1
          %s926 = scalar_lea.sflag [#allocation3], %s925
          %s927 = sand.u32 %s231, 1
          %s928 = smul.addr %s927, 16
          %s929 = scalar_lea.vmem [#allocation2], %s928
          %930 = dma.done %s926, 256
        $region68: #{tpu_custom_call.1} parent=63 // pred_fallthru
          _
      $region64: #{tpu_custom_call.1} parent=5 // pred_fallthru
        _
    $region6: #{tpu_custom_call.1} parent=1 // loop_footer
      %s22 = sadd.s32 1, %s18
    $region7: #{tpu_custom_call.1} parent=1 // loop_footer_branch
      %17 = sbr.rel target = $region3
    $region8: #{tpu_custom_call.1} parent=1 // loop_exit
      _
    %931 = vsyncpa [#allocation3], 1
    %s932 = scalar_lea.sflag [#allocation3], 1
    %933 = vsyncpa %s932, 1

</llo_original>
